<compile_context>
chip_gen: v7x
topology: tpu7x:2x2x1
jax: 0.10.0
libtpu: 0.0.40
codegen_flags: <defaults>
</compile_context>

<pallas_src>
import math

import jax
import jax.numpy as jnp
from jax.experimental import pallas as pl
from jax.experimental.pallas import tpu as pltpu

HIDDEN = 500       # PyTorch hidden width
HIDDEN_PAD = 512   # padded to 4 x 128 lanes


# ---------------------------------------------------------------- kernels ----

def _encoder_kernel(x_ref, w1_ref, b1_ref, w2_ref, b2_ref, wh_ref, bh_ref,
                    out_ref):
    """x:(TB,D) bf16 -> out:(TB,2L) f32 = [mu | logvar]."""
    x = x_ref[...]
    h1 = jnp.dot(x, w1_ref[...], preferred_element_type=jnp.float32) + b1_ref[...]
    h1 = jnp.maximum(h1, 0.0).astype(jnp.bfloat16)
    h2 = jnp.dot(h1, w2_ref[...], preferred_element_type=jnp.float32) + b2_ref[...]
    h2 = jnp.maximum(h2, 0.0).astype(jnp.bfloat16)
    out_ref[...] = (jnp.dot(h2, wh_ref[...], preferred_element_type=jnp.float32)
                    + bh_ref[...])


def _decoder_classifier_kernel(z_ref, wd1_ref, bd1_ref, wd2_ref, bd2_ref,
                               wc_ref, bc_ref, xr_ref, qy_ref):
    """z:(TB,L) bf16 -> xr:(TB,D) sigmoid, qy:(TB,NC) softmax."""
    z = z_ref[...]
    h = jnp.dot(z, wd1_ref[...], preferred_element_type=jnp.float32) + bd1_ref[...]
    h = jnp.maximum(h, 0.0).astype(jnp.bfloat16)
    logits_x = (jnp.dot(h, wd2_ref[...], preferred_element_type=jnp.float32)
                + bd2_ref[...])
    xr_ref[...] = 1.0 / (1.0 + jnp.exp(-logits_x))
    logits_c = (jnp.dot(z, wc_ref[...], preferred_element_type=jnp.float32)
                + bc_ref[...])
    m = jnp.max(logits_c, axis=-1, keepdims=True)
    e = jnp.exp(logits_c - m)
    qy_ref[...] = e / jnp.sum(e, axis=-1, keepdims=True)


# -------------------------------------------------------- parameter prep ----

def init_params(key, input_dim, latent_dim, num_classes, hidden=HIDDEN):
    """PyTorch-convention (out, in) weights for every Linear in Network."""
    ks = jax.random.split(key, 14)

    def lin(kw, kb, fan_in, fan_out):
        bound = 1.0 / jnp.sqrt(fan_in)
        w = jax.random.uniform(kw, (fan_out, fan_in), jnp.float32, -bound, bound)
        b = jax.random.uniform(kb, (fan_out,), jnp.float32, -bound, bound)
        return w, b

    w1, b1 = lin(ks[0], ks[1], input_dim, hidden)
    w2, b2 = lin(ks[2], ks[3], hidden, hidden)
    wmu, bmu = lin(ks[4], ks[5], hidden, latent_dim)
    wlv, blv = lin(ks[6], ks[7], hidden, latent_dim)
    dw1, db1 = lin(ks[8], ks[9], latent_dim, hidden)
    dw2, db2 = lin(ks[10], ks[11], hidden, input_dim)
    cw, cb = lin(ks[12], ks[13], latent_dim, num_classes)
    return dict(w1=w1, b1=b1, w2=w2, b2=b2, wmu=wmu, bmu=bmu, wlv=wlv, blv=blv,
                dec_w1=dw1, dec_b1=db1, dec_w2=dw2, dec_b2=db2,
                cls_w=cw, cls_b=cb)


def prepare_params(p):
    """Transpose to (in,out), zero-pad hidden 500->512, cast weights to bf16."""
    bf, f32 = jnp.bfloat16, jnp.float32

    def pad_cols(a, n): return jnp.pad(a, ((0, 0), (0, n - a.shape[1])))
    def pad_rows(a, n): return jnp.pad(a, ((0, n - a.shape[0]), (0, 0)))
    def pad_vec(v, n): return jnp.pad(v, (0, n - v.shape[0]))

    w1_t = pad_cols(p["w1"].T, HIDDEN_PAD).astype(bf)                      # (D,512)
    b1 = pad_vec(p["b1"], HIDDEN_PAD)[None, :].astype(f32)
    w2_t = pad_cols(pad_rows(p["w2"].T, HIDDEN_PAD), HIDDEN_PAD).astype(bf)  # (512,512)
    b2 = pad_vec(p["b2"], HIDDEN_PAD)[None, :].astype(f32)
    # fused mu/logvar head -> single (512, 2L) matmul
    wh = jnp.concatenate([pad_rows(p["wmu"].T, HIDDEN_PAD),
                          pad_rows(p["wlv"].T, HIDDEN_PAD)], axis=1).astype(bf)
    bh = jnp.concatenate([p["bmu"], p["blv"]])[None, :].astype(f32)

    wd1_t = pad_cols(p["dec_w1"].T, HIDDEN_PAD).astype(bf)                 # (L,512)
    bd1 = pad_vec(p["dec_b1"], HIDDEN_PAD)[None, :].astype(f32)
    wd2_t = pad_rows(p["dec_w2"].T, HIDDEN_PAD).astype(bf)                 # (512,D)
    bd2 = p["dec_b2"][None, :].astype(f32)
    wc_t = p["cls_w"].T.astype(bf)                                         # (L,NC)
    bc = p["cls_b"][None, :].astype(f32)
    return dict(w1_t=w1_t, b1=b1, w2_t=w2_t, b2=b2, wh=wh, bh=bh,
                wd1_t=wd1_t, bd1=bd1, wd2_t=wd2_t, bd2=bd2, wc_t=wc_t, bc=bc)


# --------------------------------------------------------------- forward ----

def network_forward(x, prep, key, prior="normal"):
    """Returns (xr, z, mu, logvar, qycz), matching Network.forward semantics."""
    B = x.shape[0]
    input_shape = x.shape[1:]
    D = math.prod(input_shape)
    x_flat = x.reshape(B, D)

    # Batch tiling: bf16 sublane tile is 16 rows; keep batch blocks >= 16.
    if B >= 128:
        TB = 128
        B_pad = ((B + TB - 1) // TB) * TB
    else:
        B_pad = max(16, ((B + 15) // 16) * 16)
        TB = B_pad
    if B_pad != B:
        x_flat = jnp.pad(x_flat, ((0, B_pad - B), (0, 0)))
    grid = (B_pad // TB,)

    L2 = prep["wh"].shape[1]
    L = L2 // 2
    NC = prep["wc_t"].shape[1]

    def resident(shape):   # weights/biases: same block every step -> stay in VMEM
        return pl.BlockSpec(shape, lambda i: (0, 0))

    def batched(shape):    # activations/outputs: blocked along batch
        return pl.BlockSpec(shape, lambda i: (i, 0))

    cparams = pltpu.CompilerParams(
        dimension_semantics=("parallel",),
        vmem_limit_bytes=32 << 20,   # fits v7x's 64 MiB physical VMEM with headroom
    )

    enc_out = pl.pallas_call(
        _encoder_kernel,
        out_shape=jax.ShapeDtypeStruct((B_pad, L2), jnp.float32),
        grid=grid,
        in_specs=[batched((TB, D)),
                  resident((D, HIDDEN_PAD)), resident((1, HIDDEN_PAD)),
                  resident((HIDDEN_PAD, HIDDEN_PAD)), resident((1, HIDDEN_PAD)),
                  resident((HIDDEN_PAD, L2)), resident((1, L2))],
        out_specs=batched((TB, L2)),
        compiler_params=cparams,
    )(x_flat.astype(jnp.bfloat16), prep["w1_t"], prep["b1"],
      prep["w2_t"], prep["b2"], prep["wh"], prep["bh"])

    mu_full = enc_out[:, :L]
    logvar_full = enc_out[:, L:]

    # Reparameterized sample (elementwise + RNG; done in plain JAX, not a kernel).
    scale = jnp.exp(0.5 * logvar_full)
    if prior == "normal":
        eps = jax.random.normal(key, mu_full.shape, jnp.float32)
        z_full = mu_full + scale * eps
    elif prior == "laplace":
        u = jax.random.uniform(key, mu_full.shape, jnp.float32, -0.5 + 1e-6, 0.5)
        z_full = mu_full - scale * jnp.sign(u) * jnp.log1p(-2.0 * jnp.abs(u))
    else:
        raise NotImplementedError(f"undefined prior {prior}")

    xr_flat, qycz_full = pl.pallas_call(
        _decoder_classifier_kernel,
        out_shape=(jax.ShapeDtypeStruct((B_pad, D), jnp.float32),
                   jax.ShapeDtypeStruct((B_pad, NC), jnp.float32)),
        grid=grid,
        in_specs=[batched((TB, L)),
                  resident((L, HIDDEN_PAD)), resident((1, HIDDEN_PAD)),
                  resident((HIDDEN_PAD, D)), resident((1, D)),
                  resident((L, NC)), resident((1, NC))],
        out_specs=(batched((TB, D)), batched((TB, NC))),
        compiler_params=cparams,
    )(z_full.astype(jnp.bfloat16), prep["wd1_t"], prep["bd1"],
      prep["wd2_t"], prep["bd2"], prep["wc_t"], prep["bc"])

    xr = xr_flat[:B].reshape((B,) + tuple(input_shape))
    return xr, z_full[:B], mu_full[:B], logvar_full[:B], qycz_full[:B]


# ------------------------------------------------------------------ main ----

if __name__ == "__main__":
    key = jax.random.PRNGKey(0)
    k_x, k_p, k_eps = jax.random.split(key, 3)

    B, C, Himg, Wimg = 2, 4, 16, 16
    latent_dim = 32           # feature_dim
    num_classes = 10
    input_dim = C * Himg * Wimg   # 1024

    x = jax.random.normal(k_x, (B, C, Himg, Wimg), jnp.float32)
    params = init_params(k_p, input_dim, latent_dim, num_classes)
    prep = prepare_params(params)

    xr, z, mu, logvar, qycz = network_forward(x, prep, k_eps, prior="normal")
    jax.block_until_ready((xr, z, mu, logvar, qycz))

    # Pure-JAX f32 reference (kernel uses bf16 weights -> loose tolerance).
    p = params
    xf = x.reshape(B, -1)
    h1 = jnp.maximum(xf @ p["w1"].T + p["b1"], 0.0)
    h2 = jnp.maximum(h1 @ p["w2"].T + p["b2"], 0.0)
    mu_ref = h2 @ p["wmu"].T + p["bmu"]
    lv_ref = h2 @ p["wlv"].T + p["blv"]
    assert jnp.allclose(mu, mu_ref, atol=5e-2, rtol=5e-2), "mu mismatch"
    assert jnp.allclose(logvar, lv_ref, atol=5e-2, rtol=5e-2), "logvar mismatch"

    # Decoder / classifier reference using the kernel's own z (same eps path).
    hd = jnp.maximum(z @ p["dec_w1"].T + p["dec_b1"], 0.0)
    xr_ref = jax.nn.sigmoid(hd @ p["dec_w2"].T + p["dec_b2"]).reshape(B, C, Himg, Wimg)
    qy_ref = jax.nn.softmax(z @ p["cls_w"].T + p["cls_b"], axis=1)
    assert jnp.allclose(xr, xr_ref, atol=5e-2, rtol=5e-2), "xr mismatch"
    assert jnp.allclose(qycz, qy_ref, atol=5e-2, rtol=5e-2), "qycz mismatch"

    print("KERNEL_OK")
</pallas_src>

<mosaic_0001>
module attributes {stable_mosaic.version = 11 : i64} {
  func.func @_encoder_kernel(%arg0: i32, %arg1: memref<16x1024xbf16, #tpu.memory_space<vmem>>, %arg2: memref<1024x512xbf16, #tpu.memory_space<vmem>>, %arg3: memref<1x512xf32, #tpu.memory_space<vmem>>, %arg4: memref<512x512xbf16, #tpu.memory_space<vmem>>, %arg5: memref<1x512xf32, #tpu.memory_space<vmem>>, %arg6: memref<512x64xbf16, #tpu.memory_space<vmem>>, %arg7: memref<1x64xf32, #tpu.memory_space<vmem>>, %arg8: memref<16x64xf32, #tpu.memory_space<vmem>>) attributes {dimension_semantics = [#tpu.dimension_semantics<parallel>], iteration_bounds = array<i64: 1>, scalar_prefetch = 0 : i64, scratch_operands = 0 : i64, tpu.core_type = #tpu.core_type<tc>, window_params = [{transform_indices = @transform_0, window_bounds = array<i64: 16, 1024>}, {pipeline_mode = #tpu.pipeline_mode<synchronous>, transform_indices = @transform_1, window_bounds = array<i64: 1024, 512>}, {pipeline_mode = #tpu.pipeline_mode<synchronous>, transform_indices = @transform_2, window_bounds = array<i64: 1, 512>}, {pipeline_mode = #tpu.pipeline_mode<synchronous>, transform_indices = @transform_3, window_bounds = array<i64: 512, 512>}, {pipeline_mode = #tpu.pipeline_mode<synchronous>, transform_indices = @transform_4, window_bounds = array<i64: 1, 512>}, {pipeline_mode = #tpu.pipeline_mode<synchronous>, transform_indices = @transform_5, window_bounds = array<i64: 512, 64>}, {pipeline_mode = #tpu.pipeline_mode<synchronous>, transform_indices = @transform_6, window_bounds = array<i64: 1, 64>}, {transform_indices = @transform_7, window_bounds = array<i64: 16, 64>}]} {
    %c0 = arith.constant 0 : index
    %c0_0 = arith.constant 0 : index
    %0 = vector.load %arg1[%c0, %c0_0] : memref<16x1024xbf16, #tpu.memory_space<vmem>>, vector<16x1024xbf16>
    %c0_1 = arith.constant 0 : index
    %c0_2 = arith.constant 0 : index
    %1 = vector.load %arg2[%c0_1, %c0_2] : memref<1024x512xbf16, #tpu.memory_space<vmem>>, vector<1024x512xbf16>
    %cst = arith.constant dense<0.000000e+00> : vector<16x512xf32>
    %2 = tpu.matmul %0, %1, %cst {dimension_numbers = #tpu.dot_dimension_numbers<[1], [0], [0], [1], [0, 0, 1, 1], [], []>} : vector<16x1024xbf16>, vector<1024x512xbf16>, vector<16x512xf32> -> vector<16x512xf32>
    %c0_3 = arith.constant 0 : index
    %c0_4 = arith.constant 0 : index
    %3 = vector.load %arg3[%c0_3, %c0_4] : memref<1x512xf32, #tpu.memory_space<vmem>>, vector<1x512xf32>
    %4 = vector.broadcast %3 : vector<1x512xf32> to vector<16x512xf32>
    %5 = arith.addf %2, %4 : vector<16x512xf32>
    %cst_5 = arith.constant 0.000000e+00 : f32
    %6 = vector.broadcast %cst_5 : f32 to vector<16x512xf32>
    %7 = arith.maximumf %5, %6 : vector<16x512xf32>
    %8 = arith.truncf %7 : vector<16x512xf32> to vector<16x512xbf16>
    %c0_6 = arith.constant 0 : index
    %c0_7 = arith.constant 0 : index
    %9 = vector.load %arg4[%c0_6, %c0_7] : memref<512x512xbf16, #tpu.memory_space<vmem>>, vector<512x512xbf16>
    %cst_8 = arith.constant dense<0.000000e+00> : vector<16x512xf32>
    %10 = tpu.matmul %8, %9, %cst_8 {dimension_numbers = #tpu.dot_dimension_numbers<[1], [0], [0], [1], [0, 0, 1, 1], [], []>} : vector<16x512xbf16>, vector<512x512xbf16>, vector<16x512xf32> -> vector<16x512xf32>
    %c0_9 = arith.constant 0 : index
    %c0_10 = arith.constant 0 : index
    %11 = vector.load %arg5[%c0_9, %c0_10] : memref<1x512xf32, #tpu.memory_space<vmem>>, vector<1x512xf32>
    %12 = vector.broadcast %11 : vector<1x512xf32> to vector<16x512xf32>
    %13 = arith.addf %10, %12 : vector<16x512xf32>
    %cst_11 = arith.constant 0.000000e+00 : f32
    %14 = vector.broadcast %cst_11 : f32 to vector<16x512xf32>
    %15 = arith.maximumf %13, %14 : vector<16x512xf32>
    %16 = arith.truncf %15 : vector<16x512xf32> to vector<16x512xbf16>
    %c0_12 = arith.constant 0 : index
    %c0_13 = arith.constant 0 : index
    %17 = vector.load %arg6[%c0_12, %c0_13] : memref<512x64xbf16, #tpu.memory_space<vmem>>, vector<512x64xbf16>
    %cst_14 = arith.constant dense<0.000000e+00> : vector<16x64xf32>
    %18 = tpu.matmul %16, %17, %cst_14 {dimension_numbers = #tpu.dot_dimension_numbers<[1], [0], [0], [1], [0, 0, 1, 1], [], []>} : vector<16x512xbf16>, vector<512x64xbf16>, vector<16x64xf32> -> vector<16x64xf32>
    %c0_15 = arith.constant 0 : index
    %c0_16 = arith.constant 0 : index
    %19 = vector.load %arg7[%c0_15, %c0_16] : memref<1x64xf32, #tpu.memory_space<vmem>>, vector<1x64xf32>
    %20 = vector.broadcast %19 : vector<1x64xf32> to vector<16x64xf32>
    %21 = arith.addf %18, %20 : vector<16x64xf32>
    %c0_17 = arith.constant 0 : index
    %c0_18 = arith.constant 0 : index
    %22 = vector.load %arg8[%c0_17, %c0_18] : memref<16x64xf32, #tpu.memory_space<vmem>>, vector<16x64xf32>
    tpu.vector_store %arg8[%c0_17, %c0_18], %21 {strides = array<i32>} : memref<16x64xf32, #tpu.memory_space<vmem>>, vector<16x64xf32>,
    return
  }
  func.func @transform_0(%arg0: i32) -> (i32, i32) {
    %c0_i32 = arith.constant 0 : i32
    %c0_i32_0 = arith.constant 0 : i32
    return %arg0, %c0_i32 : i32, i32
  }
  func.func @transform_1(%arg0: i32) -> (i32, i32) {
    %c0_i32 = arith.constant 0 : i32
    %c0_i32_0 = arith.constant 0 : i32
    %c0_i32_1 = arith.constant 0 : i32
    return %c0_i32, %c0_i32_0 : i32, i32
  }
  func.func @transform_2(%arg0: i32) -> (i32, i32) {
    %c0_i32 = arith.constant 0 : i32
    %c0_i32_0 = arith.constant 0 : i32
    %c0_i32_1 = arith.constant 0 : i32
    return %c0_i32, %c0_i32_0 : i32, i32
  }
  func.func @transform_3(%arg0: i32) -> (i32, i32) {
    %c0_i32 = arith.constant 0 : i32
    %c0_i32_0 = arith.constant 0 : i32
    %c0_i32_1 = arith.constant 0 : i32
    return %c0_i32, %c0_i32_0 : i32, i32
  }
  func.func @transform_4(%arg0: i32) -> (i32, i32) {
    %c0_i32 = arith.constant 0 : i32
    %c0_i32_0 = arith.constant 0 : i32
    %c0_i32_1 = arith.constant 0 : i32
    return %c0_i32, %c0_i32_0 : i32, i32
  }
  func.func @transform_5(%arg0: i32) -> (i32, i32) {
    %c0_i32 = arith.constant 0 : i32
    %c0_i32_0 = arith.constant 0 : i32
    %c0_i32_1 = arith.constant 0 : i32
    return %c0_i32, %c0_i32_0 : i32, i32
  }
  func.func @transform_6(%arg0: i32) -> (i32, i32) {
    %c0_i32 = arith.constant 0 : i32
    %c0_i32_0 = arith.constant 0 : i32
    %c0_i32_1 = arith.constant 0 : i32
    return %c0_i32, %c0_i32_0 : i32, i32
  }
  func.func @transform_7(%arg0: i32) -> (i32, i32) {
    %c0_i32 = arith.constant 0 : i32
    %c0_i32_0 = arith.constant 0 : i32
    return %arg0, %c0_i32 : i32, i32
  }
}

</mosaic_0001>

<llo_original>
// kernel: tpu_custom_call.1
$region0: #{tpu_custom_call.1}
  #allocation0 [shape = 'u32[]', space=smem, size = 0x4, offset = 0x4, fixed_abs, tag = 'smem constant byte address 0x4 - core index']
  #allocation1 [shape = 'u32[144,128]{1,0:T(1,128)}', space=vmem, size = 0x12000, scoped, tag = 'internal scratch']
  %s0 = inlined_call_operand.vmem [shape: bf16[16,1024], index: 0, kind: input, shape index: {}]
  %s1 = inlined_call_operand.hbm [shape: bf16[1024,512], index: 1, kind: input, shape index: {}]
  %s2 = inlined_call_operand.vmem [shape: f32[1,512], index: 2, kind: input, shape index: {}]
  %s3 = inlined_call_operand.hbm [shape: bf16[512,512], index: 3, kind: input, shape index: {}]
  %s4 = inlined_call_operand.vmem [shape: f32[1,512], index: 4, kind: input, shape index: {}]
  %s5 = inlined_call_operand.vmem [shape: bf16[512,64], index: 5, kind: input, shape index: {}]
  %s6 = inlined_call_operand.vmem [shape: f32[1,64], index: 6, kind: input, shape index: {}]
  %s7 = inlined_call_operand.hbm [shape: f32[16,64], index: 7, kind: output, shape index: {}]
  %s8 = sld [smem:[#allocation0]]
  $region46: #{tpu_custom_call.1} parent=0
    _
  %s10 = ssub.s32 1, %s8
  %s11 = scalar_select 0, %s10, %s8
  $region1: #{tpu_custom_call.1} parent=0
    #allocation2 [shape = 'u8[1048576]{0}', space=vmem, size = 0x100000, scoped, tag = 'input window, operand 1, single buffered']
    #allocation3 [shape = 's32[1]{0}', space=sflag, size = 0x4, scoped, tag = 'scoped memory for tpu_custom_call.1']
    #allocation4 [shape = 's32[1]{0}', space=sflag, size = 0x4, scoped, tag = 'scoped memory for tpu_custom_call.1']
    #allocation5 [shape = 'u8[524288]{0}', space=vmem, size = 0x80000, scoped, tag = 'input window, operand 3, single buffered']
    #allocation6 [shape = 's32[1]{0}', space=sflag, size = 0x4, scoped, tag = 'scoped memory for tpu_custom_call.1']
    #allocation7 [shape = 'u8[8192]{0}', space=vmem, size = 0x2000, scoped, tag = 'output window, operand 0, single buffered']
    %12 = vsyncpa [#allocation3], 0
    %13 = vsyncpa [#allocation6], 0
    %14 = vsyncpa [#allocation4], 0
    // Predicated region
    $region2: #{tpu_custom_call.1} parent=1 // pred_check
      _
    $region3: #{tpu_custom_call.1} parent=1 // pred_check_branch
      %16 = sbr.rel (0) target = $region5
    $region4: #{tpu_custom_call.1} parent=1 // pred_region
      _
    $region5: #{tpu_custom_call.1} parent=1 // pred_fallthru
      _
    // Predicated region
    $region6: #{tpu_custom_call.1} parent=1 // pred_check
      _
    $region7: #{tpu_custom_call.1} parent=1 // pred_check_branch
      %18 = sbr.rel (0) target = $region9
    $region8: #{tpu_custom_call.1} parent=1 // pred_region
      %s20 = ssub.s32 32768, 32768
      %21 = vsyncadd [#allocation3], %s20
      %s22 = sshll.u32 [#allocation2], 4
      %s23 = int_to_ptr.vmem [resolvable:$true] %s22
      %28 = dma.hbm_to_vmem [thread:$0]  %s1, 32768, %s23, [#allocation3], 256, 256, 16
    $region9: #{tpu_custom_call.1} parent=1 // pred_fallthru
      _
    // Predicated region
    $region10: #{tpu_custom_call.1} parent=1 // pred_check
      _
    $region11: #{tpu_custom_call.1} parent=1 // pred_check_branch
      %30 = sbr.rel (0) target = $region13
    $region12: #{tpu_custom_call.1} parent=1 // pred_region
      _
    $region13: #{tpu_custom_call.1} parent=1 // pred_fallthru
      _
    // Predicated region
    $region14: #{tpu_custom_call.1} parent=1 // pred_check
      _
    $region15: #{tpu_custom_call.1} parent=1 // pred_check_branch
      %32 = sbr.rel (0) target = $region17
    $region16: #{tpu_custom_call.1} parent=1 // pred_region
      %s34 = ssub.s32 16384, 16384
      %35 = vsyncadd [#allocation6], %s34
      %s36 = sshll.u32 [#allocation5], 4
      %s37 = int_to_ptr.vmem [resolvable:$true] %s36
      %42 = dma.hbm_to_vmem [thread:$0]  %s3, 16384, %s37, [#allocation6], 256, 256, 16
    $region17: #{tpu_custom_call.1} parent=1 // pred_fallthru
      _
    // Predicated region
    $region18: #{tpu_custom_call.1} parent=1 // pred_check
      _
    $region19: #{tpu_custom_call.1} parent=1 // pred_check_branch
      %44 = sbr.rel (0) target = $region21
    $region20: #{tpu_custom_call.1} parent=1 // pred_region
      _
    $region21: #{tpu_custom_call.1} parent=1 // pred_fallthru
      _
    // Predicated region
    $region22: #{tpu_custom_call.1} parent=1 // pred_check
      _
    $region23: #{tpu_custom_call.1} parent=1 // pred_check_branch
      %46 = sbr.rel (0) target = $region25
    $region24: #{tpu_custom_call.1} parent=1 // pred_region
      _
    $region25: #{tpu_custom_call.1} parent=1 // pred_fallthru
      _
    // Predicated region
    $region26: #{tpu_custom_call.1} parent=1 // pred_check
      _
    $region27: #{tpu_custom_call.1} parent=1 // pred_check_branch
      %48 = sbr.rel (0) target = $region29
    $region28: #{tpu_custom_call.1} parent=1 // pred_region
      _
    $region29: #{tpu_custom_call.1} parent=1 // pred_fallthru
      _
    // Predicated region
    $region30: #{tpu_custom_call.1} parent=1 // pred_check
      _
    $region31: #{tpu_custom_call.1} parent=1 // pred_check_branch
      %50 = sbr.rel (0) target = $region33
    $region32: #{tpu_custom_call.1} parent=1 // pred_region
      %51 = dma.done [#allocation3], 32768
    $region33: #{tpu_custom_call.1} parent=1 // pred_fallthru
      _
    // Predicated region
    $region34: #{tpu_custom_call.1} parent=1 // pred_check
      _
    $region35: #{tpu_custom_call.1} parent=1 // pred_check_branch
      %53 = sbr.rel (0) target = $region37
    $region36: #{tpu_custom_call.1} parent=1 // pred_region
      %54 = dma.done [#allocation6], 16384
    $region37: #{tpu_custom_call.1} parent=1 // pred_fallthru
      _
    %v56 = vld [vmem:[%s0] sm:$0xff]
    %v57 = vld [vmem:[%s0 + $0x8] sm:$0xff]
    %v58 = vld [vmem:[%s0 + $0x10] sm:$0xff]
    %v59 = vld [vmem:[%s0 + $0x18] sm:$0xff]
    %v60 = vld [vmem:[%s0 + $0x20] sm:$0xff]
    %v61 = vld [vmem:[%s0 + $0x28] sm:$0xff]
    %v62 = vld [vmem:[%s0 + $0x30] sm:$0xff]
    %v63 = vld [vmem:[%s0 + $0x38] sm:$0xff]
    %v64 = vld [vmem:[#allocation2] sm:$0xff]
    %v65 = vld [vmem:[#allocation2 + $0x8] sm:$0xff]
    %v66 = vld [vmem:[#allocation2 + $0x10] sm:$0xff]
    %v67 = vld [vmem:[#allocation2 + $0x18] sm:$0xff]
    %v68 = vld [vmem:[#allocation2 + $0x20] sm:$0xff]
    %v69 = vld [vmem:[#allocation2 + $0x28] sm:$0xff]
    %v70 = vld [vmem:[#allocation2 + $0x30] sm:$0xff]
    %v71 = vld [vmem:[#allocation2 + $0x38] sm:$0xff]
    %v72 = vld [vmem:[#allocation2 + $0x40] sm:$0xff]
    %v73 = vld [vmem:[#allocation2 + $0x48] sm:$0xff]
    %v74 = vld [vmem:[#allocation2 + $0x50] sm:$0xff]
    %v75 = vld [vmem:[#allocation2 + $0x58] sm:$0xff]
    %v76 = vld [vmem:[#allocation2 + $0x60] sm:$0xff]
    %v77 = vld [vmem:[#allocation2 + $0x68] sm:$0xff]
    %v78 = vld [vmem:[#allocation2 + $0x70] sm:$0xff]
    %v79 = vld [vmem:[#allocation2 + $0x78] sm:$0xff]
    %v80 = vld [vmem:[#allocation2 + $0x80] sm:$0xff]
    %v81 = vld [vmem:[#allocation2 + $0x88] sm:$0xff]
    %v82 = vld [vmem:[#allocation2 + $0x90] sm:$0xff]
    %v83 = vld [vmem:[#allocation2 + $0x98] sm:$0xff]
    %v84 = vld [vmem:[#allocation2 + $0xa0] sm:$0xff]
    %v85 = vld [vmem:[#allocation2 + $0xa8] sm:$0xff]
    %v86 = vld [vmem:[#allocation2 + $0xb0] sm:$0xff]
    %v87 = vld [vmem:[#allocation2 + $0xb8] sm:$0xff]
    %v88 = vld [vmem:[#allocation2 + $0xc0] sm:$0xff]
    %v89 = vld [vmem:[#allocation2 + $0xc8] sm:$0xff]
    %v90 = vld [vmem:[#allocation2 + $0xd0] sm:$0xff]
    %v91 = vld [vmem:[#allocation2 + $0xd8] sm:$0xff]
    %v92 = vld [vmem:[#allocation2 + $0xe0] sm:$0xff]
    %v93 = vld [vmem:[#allocation2 + $0xe8] sm:$0xff]
    %v94 = vld [vmem:[#allocation2 + $0xf0] sm:$0xff]
    %v95 = vld [vmem:[#allocation2 + $0xf8] sm:$0xff]
    %v96 = vld [vmem:[#allocation2 + $0x100] sm:$0xff]
    %v97 = vld [vmem:[#allocation2 + $0x108] sm:$0xff]
    %v98 = vld [vmem:[#allocation2 + $0x110] sm:$0xff]
    %v99 = vld [vmem:[#allocation2 + $0x118] sm:$0xff]
    %v100 = vld [vmem:[#allocation2 + $0x120] sm:$0xff]
    %v101 = vld [vmem:[#allocation2 + $0x128] sm:$0xff]
    %v102 = vld [vmem:[#allocation2 + $0x130] sm:$0xff]
    %v103 = vld [vmem:[#allocation2 + $0x138] sm:$0xff]
    %v104 = vld [vmem:[#allocation2 + $0x140] sm:$0xff]
    %v105 = vld [vmem:[#allocation2 + $0x148] sm:$0xff]
    %v106 = vld [vmem:[#allocation2 + $0x150] sm:$0xff]
    %v107 = vld [vmem:[#allocation2 + $0x158] sm:$0xff]
    %v108 = vld [vmem:[#allocation2 + $0x160] sm:$0xff]
    %v109 = vld [vmem:[#allocation2 + $0x168] sm:$0xff]
    %v110 = vld [vmem:[#allocation2 + $0x170] sm:$0xff]
    %v111 = vld [vmem:[#allocation2 + $0x178] sm:$0xff]
    %v112 = vld [vmem:[#allocation2 + $0x180] sm:$0xff]
    %v113 = vld [vmem:[#allocation2 + $0x188] sm:$0xff]
    %v114 = vld [vmem:[#allocation2 + $0x190] sm:$0xff]
    %v115 = vld [vmem:[#allocation2 + $0x198] sm:$0xff]
    %v116 = vld [vmem:[#allocation2 + $0x1a0] sm:$0xff]
    %v117 = vld [vmem:[#allocation2 + $0x1a8] sm:$0xff]
    %v118 = vld [vmem:[#allocation2 + $0x1b0] sm:$0xff]
    %v119 = vld [vmem:[#allocation2 + $0x1b8] sm:$0xff]
    %v120 = vld [vmem:[#allocation2 + $0x1c0] sm:$0xff]
    %v121 = vld [vmem:[#allocation2 + $0x1c8] sm:$0xff]
    %v122 = vld [vmem:[#allocation2 + $0x1d0] sm:$0xff]
    %v123 = vld [vmem:[#allocation2 + $0x1d8] sm:$0xff]
    %v124 = vld [vmem:[#allocation2 + $0x1e0] sm:$0xff]
    %v125 = vld [vmem:[#allocation2 + $0x1e8] sm:$0xff]
    %v126 = vld [vmem:[#allocation2 + $0x1f0] sm:$0xff]
    %v127 = vld [vmem:[#allocation2 + $0x1f8] sm:$0xff]
    %v128 = vld [vmem:[#allocation2 + $0x200] sm:$0xff]
    %v129 = vld [vmem:[#allocation2 + $0x208] sm:$0xff]
    %v130 = vld [vmem:[#allocation2 + $0x210] sm:$0xff]
    %v131 = vld [vmem:[#allocation2 + $0x218] sm:$0xff]
    %v132 = vld [vmem:[#allocation2 + $0x220] sm:$0xff]
    %v133 = vld [vmem:[#allocation2 + $0x228] sm:$0xff]
    %v134 = vld [vmem:[#allocation2 + $0x230] sm:$0xff]
    %v135 = vld [vmem:[#allocation2 + $0x238] sm:$0xff]
    %v136 = vld [vmem:[#allocation2 + $0x240] sm:$0xff]
    %v137 = vld [vmem:[#allocation2 + $0x248] sm:$0xff]
    %v138 = vld [vmem:[#allocation2 + $0x250] sm:$0xff]
    %v139 = vld [vmem:[#allocation2 + $0x258] sm:$0xff]
    %v140 = vld [vmem:[#allocation2 + $0x260] sm:$0xff]
    %v141 = vld [vmem:[#allocation2 + $0x268] sm:$0xff]
    %v142 = vld [vmem:[#allocation2 + $0x270] sm:$0xff]
    %v143 = vld [vmem:[#allocation2 + $0x278] sm:$0xff]
    %v144 = vld [vmem:[#allocation2 + $0x280] sm:$0xff]
    %v145 = vld [vmem:[#allocation2 + $0x288] sm:$0xff]
    %v146 = vld [vmem:[#allocation2 + $0x290] sm:$0xff]
    %v147 = vld [vmem:[#allocation2 + $0x298] sm:$0xff]
    %v148 = vld [vmem:[#allocation2 + $0x2a0] sm:$0xff]
    %v149 = vld [vmem:[#allocation2 + $0x2a8] sm:$0xff]
    %v150 = vld [vmem:[#allocation2 + $0x2b0] sm:$0xff]
    %v151 = vld [vmem:[#allocation2 + $0x2b8] sm:$0xff]
    %v152 = vld [vmem:[#allocation2 + $0x2c0] sm:$0xff]
    %v153 = vld [vmem:[#allocation2 + $0x2c8] sm:$0xff]
    %v154 = vld [vmem:[#allocation2 + $0x2d0] sm:$0xff]
    %v155 = vld [vmem:[#allocation2 + $0x2d8] sm:$0xff]
    %v156 = vld [vmem:[#allocation2 + $0x2e0] sm:$0xff]
    %v157 = vld [vmem:[#allocation2 + $0x2e8] sm:$0xff]
    %v158 = vld [vmem:[#allocation2 + $0x2f0] sm:$0xff]
    %v159 = vld [vmem:[#allocation2 + $0x2f8] sm:$0xff]
    %v160 = vld [vmem:[#allocation2 + $0x300] sm:$0xff]
    %v161 = vld [vmem:[#allocation2 + $0x308] sm:$0xff]
    %v162 = vld [vmem:[#allocation2 + $0x310] sm:$0xff]
    %v163 = vld [vmem:[#allocation2 + $0x318] sm:$0xff]
    %v164 = vld [vmem:[#allocation2 + $0x320] sm:$0xff]
    %v165 = vld [vmem:[#allocation2 + $0x328] sm:$0xff]
    %v166 = vld [vmem:[#allocation2 + $0x330] sm:$0xff]
    %v167 = vld [vmem:[#allocation2 + $0x338] sm:$0xff]
    %v168 = vld [vmem:[#allocation2 + $0x340] sm:$0xff]
    %v169 = vld [vmem:[#allocation2 + $0x348] sm:$0xff]
    %v170 = vld [vmem:[#allocation2 + $0x350] sm:$0xff]
    %v171 = vld [vmem:[#allocation2 + $0x358] sm:$0xff]
    %v172 = vld [vmem:[#allocation2 + $0x360] sm:$0xff]
    %v173 = vld [vmem:[#allocation2 + $0x368] sm:$0xff]
    %v174 = vld [vmem:[#allocation2 + $0x370] sm:$0xff]
    %v175 = vld [vmem:[#allocation2 + $0x378] sm:$0xff]
    %v176 = vld [vmem:[#allocation2 + $0x380] sm:$0xff]
    %v177 = vld [vmem:[#allocation2 + $0x388] sm:$0xff]
    %v178 = vld [vmem:[#allocation2 + $0x390] sm:$0xff]
    %v179 = vld [vmem:[#allocation2 + $0x398] sm:$0xff]
    %v180 = vld [vmem:[#allocation2 + $0x3a0] sm:$0xff]
    %v181 = vld [vmem:[#allocation2 + $0x3a8] sm:$0xff]
    %v182 = vld [vmem:[#allocation2 + $0x3b0] sm:$0xff]
    %v183 = vld [vmem:[#allocation2 + $0x3b8] sm:$0xff]
    %v184 = vld [vmem:[#allocation2 + $0x3c0] sm:$0xff]
    %v185 = vld [vmem:[#allocation2 + $0x3c8] sm:$0xff]
    %v186 = vld [vmem:[#allocation2 + $0x3d0] sm:$0xff]
    %v187 = vld [vmem:[#allocation2 + $0x3d8] sm:$0xff]
    %v188 = vld [vmem:[#allocation2 + $0x3e0] sm:$0xff]
    %v189 = vld [vmem:[#allocation2 + $0x3e8] sm:$0xff]
    %v190 = vld [vmem:[#allocation2 + $0x3f0] sm:$0xff]
    %v191 = vld [vmem:[#allocation2 + $0x3f8] sm:$0xff]
    %v192 = vld [vmem:[#allocation2 + $0x400] sm:$0xff]
    %v193 = vld [vmem:[#allocation2 + $0x408] sm:$0xff]
    %v194 = vld [vmem:[#allocation2 + $0x410] sm:$0xff]
    %v195 = vld [vmem:[#allocation2 + $0x418] sm:$0xff]
    %v196 = vld [vmem:[#allocation2 + $0x420] sm:$0xff]
    %v197 = vld [vmem:[#allocation2 + $0x428] sm:$0xff]
    %v198 = vld [vmem:[#allocation2 + $0x430] sm:$0xff]
    %v199 = vld [vmem:[#allocation2 + $0x438] sm:$0xff]
    %v200 = vld [vmem:[#allocation2 + $0x440] sm:$0xff]
    %v201 = vld [vmem:[#allocation2 + $0x448] sm:$0xff]
    %v202 = vld [vmem:[#allocation2 + $0x450] sm:$0xff]
    %v203 = vld [vmem:[#allocation2 + $0x458] sm:$0xff]
    %v204 = vld [vmem:[#allocation2 + $0x460] sm:$0xff]
    %v205 = vld [vmem:[#allocation2 + $0x468] sm:$0xff]
    %v206 = vld [vmem:[#allocation2 + $0x470] sm:$0xff]
    %v207 = vld [vmem:[#allocation2 + $0x478] sm:$0xff]
    %v208 = vld [vmem:[#allocation2 + $0x480] sm:$0xff]
    %v209 = vld [vmem:[#allocation2 + $0x488] sm:$0xff]
    %v210 = vld [vmem:[#allocation2 + $0x490] sm:$0xff]
    %v211 = vld [vmem:[#allocation2 + $0x498] sm:$0xff]
    %v212 = vld [vmem:[#allocation2 + $0x4a0] sm:$0xff]
    %v213 = vld [vmem:[#allocation2 + $0x4a8] sm:$0xff]
    %v214 = vld [vmem:[#allocation2 + $0x4b0] sm:$0xff]
    %v215 = vld [vmem:[#allocation2 + $0x4b8] sm:$0xff]
    %v216 = vld [vmem:[#allocation2 + $0x4c0] sm:$0xff]
    %v217 = vld [vmem:[#allocation2 + $0x4c8] sm:$0xff]
    %v218 = vld [vmem:[#allocation2 + $0x4d0] sm:$0xff]
    %v219 = vld [vmem:[#allocation2 + $0x4d8] sm:$0xff]
    %v220 = vld [vmem:[#allocation2 + $0x4e0] sm:$0xff]
    %v221 = vld [vmem:[#allocation2 + $0x4e8] sm:$0xff]
    %v222 = vld [vmem:[#allocation2 + $0x4f0] sm:$0xff]
    %v223 = vld [vmem:[#allocation2 + $0x4f8] sm:$0xff]
    %v224 = vld [vmem:[#allocation2 + $0x500] sm:$0xff]
    %v225 = vld [vmem:[#allocation2 + $0x508] sm:$0xff]
    %v226 = vld [vmem:[#allocation2 + $0x510] sm:$0xff]
    %v227 = vld [vmem:[#allocation2 + $0x518] sm:$0xff]
    %v228 = vld [vmem:[#allocation2 + $0x520] sm:$0xff]
    %v229 = vld [vmem:[#allocation2 + $0x528] sm:$0xff]
    %v230 = vld [vmem:[#allocation2 + $0x530] sm:$0xff]
    %v231 = vld [vmem:[#allocation2 + $0x538] sm:$0xff]
    %v232 = vld [vmem:[#allocation2 + $0x540] sm:$0xff]
    %v233 = vld [vmem:[#allocation2 + $0x548] sm:$0xff]
    %v234 = vld [vmem:[#allocation2 + $0x550] sm:$0xff]
    %v235 = vld [vmem:[#allocation2 + $0x558] sm:$0xff]
    %v236 = vld [vmem:[#allocation2 + $0x560] sm:$0xff]
    %v237 = vld [vmem:[#allocation2 + $0x568] sm:$0xff]
    %v238 = vld [vmem:[#allocation2 + $0x570] sm:$0xff]
    %v239 = vld [vmem:[#allocation2 + $0x578] sm:$0xff]
    %v240 = vld [vmem:[#allocation2 + $0x580] sm:$0xff]
    %v241 = vld [vmem:[#allocation2 + $0x588] sm:$0xff]
    %v242 = vld [vmem:[#allocation2 + $0x590] sm:$0xff]
    %v243 = vld [vmem:[#allocation2 + $0x598] sm:$0xff]
    %v244 = vld [vmem:[#allocation2 + $0x5a0] sm:$0xff]
    %v245 = vld [vmem:[#allocation2 + $0x5a8] sm:$0xff]
    %v246 = vld [vmem:[#allocation2 + $0x5b0] sm:$0xff]
    %v247 = vld [vmem:[#allocation2 + $0x5b8] sm:$0xff]
    %v248 = vld [vmem:[#allocation2 + $0x5c0] sm:$0xff]
    %v249 = vld [vmem:[#allocation2 + $0x5c8] sm:$0xff]
    %v250 = vld [vmem:[#allocation2 + $0x5d0] sm:$0xff]
    %v251 = vld [vmem:[#allocation2 + $0x5d8] sm:$0xff]
    %v252 = vld [vmem:[#allocation2 + $0x5e0] sm:$0xff]
    %v253 = vld [vmem:[#allocation2 + $0x5e8] sm:$0xff]
    %v254 = vld [vmem:[#allocation2 + $0x5f0] sm:$0xff]
    %v255 = vld [vmem:[#allocation2 + $0x5f8] sm:$0xff]
    %v256 = vld [vmem:[#allocation2 + $0x600] sm:$0xff]
    %v257 = vld [vmem:[#allocation2 + $0x608] sm:$0xff]
    %v258 = vld [vmem:[#allocation2 + $0x610] sm:$0xff]
    %v259 = vld [vmem:[#allocation2 + $0x618] sm:$0xff]
    %v260 = vld [vmem:[#allocation2 + $0x620] sm:$0xff]
    %v261 = vld [vmem:[#allocation2 + $0x628] sm:$0xff]
    %v262 = vld [vmem:[#allocation2 + $0x630] sm:$0xff]
    %v263 = vld [vmem:[#allocation2 + $0x638] sm:$0xff]
    %v264 = vld [vmem:[#allocation2 + $0x640] sm:$0xff]
    %v265 = vld [vmem:[#allocation2 + $0x648] sm:$0xff]
    %v266 = vld [vmem:[#allocation2 + $0x650] sm:$0xff]
    %v267 = vld [vmem:[#allocation2 + $0x658] sm:$0xff]
    %v268 = vld [vmem:[#allocation2 + $0x660] sm:$0xff]
    %v269 = vld [vmem:[#allocation2 + $0x668] sm:$0xff]
    %v270 = vld [vmem:[#allocation2 + $0x670] sm:$0xff]
    %v271 = vld [vmem:[#allocation2 + $0x678] sm:$0xff]
    %v272 = vld [vmem:[#allocation2 + $0x680] sm:$0xff]
    %v273 = vld [vmem:[#allocation2 + $0x688] sm:$0xff]
    %v274 = vld [vmem:[#allocation2 + $0x690] sm:$0xff]
    %v275 = vld [vmem:[#allocation2 + $0x698] sm:$0xff]
    %v276 = vld [vmem:[#allocation2 + $0x6a0] sm:$0xff]
    %v277 = vld [vmem:[#allocation2 + $0x6a8] sm:$0xff]
    %v278 = vld [vmem:[#allocation2 + $0x6b0] sm:$0xff]
    %v279 = vld [vmem:[#allocation2 + $0x6b8] sm:$0xff]
    %v280 = vld [vmem:[#allocation2 + $0x6c0] sm:$0xff]
    %v281 = vld [vmem:[#allocation2 + $0x6c8] sm:$0xff]
    %v282 = vld [vmem:[#allocation2 + $0x6d0] sm:$0xff]
    %v283 = vld [vmem:[#allocation2 + $0x6d8] sm:$0xff]
    %v284 = vld [vmem:[#allocation2 + $0x6e0] sm:$0xff]
    %v285 = vld [vmem:[#allocation2 + $0x6e8] sm:$0xff]
    %v286 = vld [vmem:[#allocation2 + $0x6f0] sm:$0xff]
    %v287 = vld [vmem:[#allocation2 + $0x6f8] sm:$0xff]
    %v288 = vld [vmem:[#allocation2 + $0x700] sm:$0xff]
    %v289 = vld [vmem:[#allocation2 + $0x708] sm:$0xff]
    %v290 = vld [vmem:[#allocation2 + $0x710] sm:$0xff]
    %v291 = vld [vmem:[#allocation2 + $0x718] sm:$0xff]
    %v292 = vld [vmem:[#allocation2 + $0x720] sm:$0xff]
    %v293 = vld [vmem:[#allocation2 + $0x728] sm:$0xff]
    %v294 = vld [vmem:[#allocation2 + $0x730] sm:$0xff]
    %v295 = vld [vmem:[#allocation2 + $0x738] sm:$0xff]
    %v296 = vld [vmem:[#allocation2 + $0x740] sm:$0xff]
    %v297 = vld [vmem:[#allocation2 + $0x748] sm:$0xff]
    %v298 = vld [vmem:[#allocation2 + $0x750] sm:$0xff]
    %v299 = vld [vmem:[#allocation2 + $0x758] sm:$0xff]
    %v300 = vld [vmem:[#allocation2 + $0x760] sm:$0xff]
    %v301 = vld [vmem:[#allocation2 + $0x768] sm:$0xff]
    %v302 = vld [vmem:[#allocation2 + $0x770] sm:$0xff]
    %v303 = vld [vmem:[#allocation2 + $0x778] sm:$0xff]
    %v304 = vld [vmem:[#allocation2 + $0x780] sm:$0xff]
    %v305 = vld [vmem:[#allocation2 + $0x788] sm:$0xff]
    %v306 = vld [vmem:[#allocation2 + $0x790] sm:$0xff]
    %v307 = vld [vmem:[#allocation2 + $0x798] sm:$0xff]
    %v308 = vld [vmem:[#allocation2 + $0x7a0] sm:$0xff]
    %v309 = vld [vmem:[#allocation2 + $0x7a8] sm:$0xff]
    %v310 = vld [vmem:[#allocation2 + $0x7b0] sm:$0xff]
    %v311 = vld [vmem:[#allocation2 + $0x7b8] sm:$0xff]
    %v312 = vld [vmem:[#allocation2 + $0x7c0] sm:$0xff]
    %v313 = vld [vmem:[#allocation2 + $0x7c8] sm:$0xff]
    %v314 = vld [vmem:[#allocation2 + $0x7d0] sm:$0xff]
    %v315 = vld [vmem:[#allocation2 + $0x7d8] sm:$0xff]
    %v316 = vld [vmem:[#allocation2 + $0x7e0] sm:$0xff]
    %v317 = vld [vmem:[#allocation2 + $0x7e8] sm:$0xff]
    %v318 = vld [vmem:[#allocation2 + $0x7f0] sm:$0xff]
    %v319 = vld [vmem:[#allocation2 + $0x7f8] sm:$0xff]
    %v320 = vld [vmem:[%s2] sm:$0xf]
    %v322 = vlaneseq
    %v323 = vshrl.u32 %v322, 7
    %v324 = vsub.s32 0, %v323
    %v325 = vrot.slane %v320, %v324
    %v326 = vlaneseq
    %v327 = vshrl.u32 %v326, 7
    %v328 = vsub.s32 1, %v327
    %v329 = vrot.slane %v320, %v328
    %v330 = vlaneseq
    %v331 = vshrl.u32 %v330, 7
    %v332 = vsub.s32 2, %v331
    %v333 = vrot.slane %v320, %v332
    %v334 = vlaneseq
    %v335 = vshrl.u32 %v334, 7
    %v336 = vsub.s32 3, %v335
    %v337 = vrot.slane %v320, %v336
    %v350 = vunpack.c.l.b16 %v56
    %v351 = vunpack.c.h.b16 %v56
    %v352 = vunpack.c.l.b16 %v57
    %v353 = vunpack.c.h.b16 %v57
    %v354 = vunpack.c.l.b16 %v58
    %v355 = vunpack.c.h.b16 %v58
    %v356 = vunpack.c.l.b16 %v59
    %v357 = vunpack.c.h.b16 %v59
    %v358 = vunpack.c.l.b16 %v60
    %v359 = vunpack.c.h.b16 %v60
    %v360 = vunpack.c.l.b16 %v61
    %v361 = vunpack.c.h.b16 %v61
    %v362 = vunpack.c.l.b16 %v62
    %v363 = vunpack.c.h.b16 %v62
    %v364 = vunpack.c.l.b16 %v63
    %v365 = vunpack.c.h.b16 %v63
    %v366 = vpack.c.b16 %v358, %v350
    %v367 = vpack.c.b16 %v359, %v351
    %v368 = vpack.c.b16 %v360, %v352
    %v369 = vpack.c.b16 %v361, %v353
    %v370 = vpack.c.b16 %v362, %v354
    %v371 = vpack.c.b16 %v363, %v355
    %v372 = vpack.c.b16 %v364, %v356
    %v373 = vpack.c.b16 %v365, %v357
    %v638 = vunpack.c.l.b16 %v64
    %v639 = vunpack.c.h.b16 %v64
    %v640 = vunpack.c.l.b16 %v65
    %v641 = vunpack.c.h.b16 %v65
    %v642 = vunpack.c.l.b16 %v66
    %v643 = vunpack.c.h.b16 %v66
    %v644 = vunpack.c.l.b16 %v67
    %v645 = vunpack.c.h.b16 %v67
    %v646 = vunpack.c.l.b16 %v68
    %v647 = vunpack.c.h.b16 %v68
    %v648 = vunpack.c.l.b16 %v69
    %v649 = vunpack.c.h.b16 %v69
    %v650 = vunpack.c.l.b16 %v70
    %v651 = vunpack.c.h.b16 %v70
    %v652 = vunpack.c.l.b16 %v71
    %v653 = vunpack.c.h.b16 %v71
    %v654 = vunpack.c.l.b16 %v72
    %v655 = vunpack.c.h.b16 %v72
    %v656 = vunpack.c.l.b16 %v73
    %v657 = vunpack.c.h.b16 %v73
    %v658 = vunpack.c.l.b16 %v74
    %v659 = vunpack.c.h.b16 %v74
    %v660 = vunpack.c.l.b16 %v75
    %v661 = vunpack.c.h.b16 %v75
    %v662 = vunpack.c.l.b16 %v76
    %v663 = vunpack.c.h.b16 %v76
    %v664 = vunpack.c.l.b16 %v77
    %v665 = vunpack.c.h.b16 %v77
    %v666 = vunpack.c.l.b16 %v78
    %v667 = vunpack.c.h.b16 %v78
    %v668 = vunpack.c.l.b16 %v79
    %v669 = vunpack.c.h.b16 %v79
    %v670 = vunpack.c.l.b16 %v80
    %v671 = vunpack.c.h.b16 %v80
    %v672 = vunpack.c.l.b16 %v81
    %v673 = vunpack.c.h.b16 %v81
    %v674 = vunpack.c.l.b16 %v82
    %v675 = vunpack.c.h.b16 %v82
    %v676 = vunpack.c.l.b16 %v83
    %v677 = vunpack.c.h.b16 %v83
    %v678 = vunpack.c.l.b16 %v84
    %v679 = vunpack.c.h.b16 %v84
    %v680 = vunpack.c.l.b16 %v85
    %v681 = vunpack.c.h.b16 %v85
    %v682 = vunpack.c.l.b16 %v86
    %v683 = vunpack.c.h.b16 %v86
    %v684 = vunpack.c.l.b16 %v87
    %v685 = vunpack.c.h.b16 %v87
    %v686 = vunpack.c.l.b16 %v88
    %v687 = vunpack.c.h.b16 %v88
    %v688 = vunpack.c.l.b16 %v89
    %v689 = vunpack.c.h.b16 %v89
    %v690 = vunpack.c.l.b16 %v90
    %v691 = vunpack.c.h.b16 %v90
    %v692 = vunpack.c.l.b16 %v91
    %v693 = vunpack.c.h.b16 %v91
    %v694 = vunpack.c.l.b16 %v92
    %v695 = vunpack.c.h.b16 %v92
    %v696 = vunpack.c.l.b16 %v93
    %v697 = vunpack.c.h.b16 %v93
    %v698 = vunpack.c.l.b16 %v94
    %v699 = vunpack.c.h.b16 %v94
    %v700 = vunpack.c.l.b16 %v95
    %v701 = vunpack.c.h.b16 %v95
    %v702 = vunpack.c.l.b16 %v96
    %v703 = vunpack.c.h.b16 %v96
    %v704 = vunpack.c.l.b16 %v97
    %v705 = vunpack.c.h.b16 %v97
    %v706 = vunpack.c.l.b16 %v98
    %v707 = vunpack.c.h.b16 %v98
    %v708 = vunpack.c.l.b16 %v99
    %v709 = vunpack.c.h.b16 %v99
    %v710 = vunpack.c.l.b16 %v100
    %v711 = vunpack.c.h.b16 %v100
    %v712 = vunpack.c.l.b16 %v101
    %v713 = vunpack.c.h.b16 %v101
    %v714 = vunpack.c.l.b16 %v102
    %v715 = vunpack.c.h.b16 %v102
    %v716 = vunpack.c.l.b16 %v103
    %v717 = vunpack.c.h.b16 %v103
    %v718 = vunpack.c.l.b16 %v104
    %v719 = vunpack.c.h.b16 %v104
    %v720 = vunpack.c.l.b16 %v105
    %v721 = vunpack.c.h.b16 %v105
    %v722 = vunpack.c.l.b16 %v106
    %v723 = vunpack.c.h.b16 %v106
    %v724 = vunpack.c.l.b16 %v107
    %v725 = vunpack.c.h.b16 %v107
    %v726 = vunpack.c.l.b16 %v108
    %v727 = vunpack.c.h.b16 %v108
    %v728 = vunpack.c.l.b16 %v109
    %v729 = vunpack.c.h.b16 %v109
    %v730 = vunpack.c.l.b16 %v110
    %v731 = vunpack.c.h.b16 %v110
    %v732 = vunpack.c.l.b16 %v111
    %v733 = vunpack.c.h.b16 %v111
    %v734 = vunpack.c.l.b16 %v112
    %v735 = vunpack.c.h.b16 %v112
    %v736 = vunpack.c.l.b16 %v113
    %v737 = vunpack.c.h.b16 %v113
    %v738 = vunpack.c.l.b16 %v114
    %v739 = vunpack.c.h.b16 %v114
    %v740 = vunpack.c.l.b16 %v115
    %v741 = vunpack.c.h.b16 %v115
    %v742 = vunpack.c.l.b16 %v116
    %v743 = vunpack.c.h.b16 %v116
    %v744 = vunpack.c.l.b16 %v117
    %v745 = vunpack.c.h.b16 %v117
    %v746 = vunpack.c.l.b16 %v118
    %v747 = vunpack.c.h.b16 %v118
    %v748 = vunpack.c.l.b16 %v119
    %v749 = vunpack.c.h.b16 %v119
    %v750 = vunpack.c.l.b16 %v120
    %v751 = vunpack.c.h.b16 %v120
    %v752 = vunpack.c.l.b16 %v121
    %v753 = vunpack.c.h.b16 %v121
    %v754 = vunpack.c.l.b16 %v122
    %v755 = vunpack.c.h.b16 %v122
    %v756 = vunpack.c.l.b16 %v123
    %v757 = vunpack.c.h.b16 %v123
    %v758 = vunpack.c.l.b16 %v124
    %v759 = vunpack.c.h.b16 %v124
    %v760 = vunpack.c.l.b16 %v125
    %v761 = vunpack.c.h.b16 %v125
    %v762 = vunpack.c.l.b16 %v126
    %v763 = vunpack.c.h.b16 %v126
    %v764 = vunpack.c.l.b16 %v127
    %v765 = vunpack.c.h.b16 %v127
    %v766 = vunpack.c.l.b16 %v128
    %v767 = vunpack.c.h.b16 %v128
    %v768 = vunpack.c.l.b16 %v129
    %v769 = vunpack.c.h.b16 %v129
    %v770 = vunpack.c.l.b16 %v130
    %v771 = vunpack.c.h.b16 %v130
    %v772 = vunpack.c.l.b16 %v131
    %v773 = vunpack.c.h.b16 %v131
    %v774 = vunpack.c.l.b16 %v132
    %v775 = vunpack.c.h.b16 %v132
    %v776 = vunpack.c.l.b16 %v133
    %v777 = vunpack.c.h.b16 %v133
    %v778 = vunpack.c.l.b16 %v134
    %v779 = vunpack.c.h.b16 %v134
    %v780 = vunpack.c.l.b16 %v135
    %v781 = vunpack.c.h.b16 %v135
    %v782 = vunpack.c.l.b16 %v136
    %v783 = vunpack.c.h.b16 %v136
    %v784 = vunpack.c.l.b16 %v137
    %v785 = vunpack.c.h.b16 %v137
    %v786 = vunpack.c.l.b16 %v138
    %v787 = vunpack.c.h.b16 %v138
    %v788 = vunpack.c.l.b16 %v139
    %v789 = vunpack.c.h.b16 %v139
    %v790 = vunpack.c.l.b16 %v140
    %v791 = vunpack.c.h.b16 %v140
    %v792 = vunpack.c.l.b16 %v141
    %v793 = vunpack.c.h.b16 %v141
    %v794 = vunpack.c.l.b16 %v142
    %v795 = vunpack.c.h.b16 %v142
    %v796 = vunpack.c.l.b16 %v143
    %v797 = vunpack.c.h.b16 %v143
    %v798 = vunpack.c.l.b16 %v144
    %v799 = vunpack.c.h.b16 %v144
    %v800 = vunpack.c.l.b16 %v145
    %v801 = vunpack.c.h.b16 %v145
    %v802 = vunpack.c.l.b16 %v146
    %v803 = vunpack.c.h.b16 %v146
    %v804 = vunpack.c.l.b16 %v147
    %v805 = vunpack.c.h.b16 %v147
    %v806 = vunpack.c.l.b16 %v148
    %v807 = vunpack.c.h.b16 %v148
    %v808 = vunpack.c.l.b16 %v149
    %v809 = vunpack.c.h.b16 %v149
    %v810 = vunpack.c.l.b16 %v150
    %v811 = vunpack.c.h.b16 %v150
    %v812 = vunpack.c.l.b16 %v151
    %v813 = vunpack.c.h.b16 %v151
    %v814 = vunpack.c.l.b16 %v152
    %v815 = vunpack.c.h.b16 %v152
    %v816 = vunpack.c.l.b16 %v153
    %v817 = vunpack.c.h.b16 %v153
    %v818 = vunpack.c.l.b16 %v154
    %v819 = vunpack.c.h.b16 %v154
    %v820 = vunpack.c.l.b16 %v155
    %v821 = vunpack.c.h.b16 %v155
    %v822 = vunpack.c.l.b16 %v156
    %v823 = vunpack.c.h.b16 %v156
    %v824 = vunpack.c.l.b16 %v157
    %v825 = vunpack.c.h.b16 %v157
    %v826 = vunpack.c.l.b16 %v158
    %v827 = vunpack.c.h.b16 %v158
    %v828 = vunpack.c.l.b16 %v159
    %v829 = vunpack.c.h.b16 %v159
    %v830 = vunpack.c.l.b16 %v160
    %v831 = vunpack.c.h.b16 %v160
    %v832 = vunpack.c.l.b16 %v161
    %v833 = vunpack.c.h.b16 %v161
    %v834 = vunpack.c.l.b16 %v162
    %v835 = vunpack.c.h.b16 %v162
    %v836 = vunpack.c.l.b16 %v163
    %v837 = vunpack.c.h.b16 %v163
    %v838 = vunpack.c.l.b16 %v164
    %v839 = vunpack.c.h.b16 %v164
    %v840 = vunpack.c.l.b16 %v165
    %v841 = vunpack.c.h.b16 %v165
    %v842 = vunpack.c.l.b16 %v166
    %v843 = vunpack.c.h.b16 %v166
    %v844 = vunpack.c.l.b16 %v167
    %v845 = vunpack.c.h.b16 %v167
    %v846 = vunpack.c.l.b16 %v168
    %v847 = vunpack.c.h.b16 %v168
    %v848 = vunpack.c.l.b16 %v169
    %v849 = vunpack.c.h.b16 %v169
    %v850 = vunpack.c.l.b16 %v170
    %v851 = vunpack.c.h.b16 %v170
    %v852 = vunpack.c.l.b16 %v171
    %v853 = vunpack.c.h.b16 %v171
    %v854 = vunpack.c.l.b16 %v172
    %v855 = vunpack.c.h.b16 %v172
    %v856 = vunpack.c.l.b16 %v173
    %v857 = vunpack.c.h.b16 %v173
    %v858 = vunpack.c.l.b16 %v174
    %v859 = vunpack.c.h.b16 %v174
    %v860 = vunpack.c.l.b16 %v175
    %v861 = vunpack.c.h.b16 %v175
    %v862 = vunpack.c.l.b16 %v176
    %v863 = vunpack.c.h.b16 %v176
    %v864 = vunpack.c.l.b16 %v177
    %v865 = vunpack.c.h.b16 %v177
    %v866 = vunpack.c.l.b16 %v178
    %v867 = vunpack.c.h.b16 %v178
    %v868 = vunpack.c.l.b16 %v179
    %v869 = vunpack.c.h.b16 %v179
    %v870 = vunpack.c.l.b16 %v180
    %v871 = vunpack.c.h.b16 %v180
    %v872 = vunpack.c.l.b16 %v181
    %v873 = vunpack.c.h.b16 %v181
    %v874 = vunpack.c.l.b16 %v182
    %v875 = vunpack.c.h.b16 %v182
    %v876 = vunpack.c.l.b16 %v183
    %v877 = vunpack.c.h.b16 %v183
    %v878 = vunpack.c.l.b16 %v184
    %v879 = vunpack.c.h.b16 %v184
    %v880 = vunpack.c.l.b16 %v185
    %v881 = vunpack.c.h.b16 %v185
    %v882 = vunpack.c.l.b16 %v186
    %v883 = vunpack.c.h.b16 %v186
    %v884 = vunpack.c.l.b16 %v187
    %v885 = vunpack.c.h.b16 %v187
    %v886 = vunpack.c.l.b16 %v188
    %v887 = vunpack.c.h.b16 %v188
    %v888 = vunpack.c.l.b16 %v189
    %v889 = vunpack.c.h.b16 %v189
    %v890 = vunpack.c.l.b16 %v190
    %v891 = vunpack.c.h.b16 %v190
    %v892 = vunpack.c.l.b16 %v191
    %v893 = vunpack.c.h.b16 %v191
    %v894 = vunpack.c.l.b16 %v192
    %v895 = vunpack.c.h.b16 %v192
    %v896 = vunpack.c.l.b16 %v193
    %v897 = vunpack.c.h.b16 %v193
    %v898 = vunpack.c.l.b16 %v194
    %v899 = vunpack.c.h.b16 %v194
    %v900 = vunpack.c.l.b16 %v195
    %v901 = vunpack.c.h.b16 %v195
    %v902 = vunpack.c.l.b16 %v196
    %v903 = vunpack.c.h.b16 %v196
    %v904 = vunpack.c.l.b16 %v197
    %v905 = vunpack.c.h.b16 %v197
    %v906 = vunpack.c.l.b16 %v198
    %v907 = vunpack.c.h.b16 %v198
    %v908 = vunpack.c.l.b16 %v199
    %v909 = vunpack.c.h.b16 %v199
    %v910 = vunpack.c.l.b16 %v200
    %v911 = vunpack.c.h.b16 %v200
    %v912 = vunpack.c.l.b16 %v201
    %v913 = vunpack.c.h.b16 %v201
    %v914 = vunpack.c.l.b16 %v202
    %v915 = vunpack.c.h.b16 %v202
    %v916 = vunpack.c.l.b16 %v203
    %v917 = vunpack.c.h.b16 %v203
    %v918 = vunpack.c.l.b16 %v204
    %v919 = vunpack.c.h.b16 %v204
    %v920 = vunpack.c.l.b16 %v205
    %v921 = vunpack.c.h.b16 %v205
    %v922 = vunpack.c.l.b16 %v206
    %v923 = vunpack.c.h.b16 %v206
    %v924 = vunpack.c.l.b16 %v207
    %v925 = vunpack.c.h.b16 %v207
    %v926 = vunpack.c.l.b16 %v208
    %v927 = vunpack.c.h.b16 %v208
    %v928 = vunpack.c.l.b16 %v209
    %v929 = vunpack.c.h.b16 %v209
    %v930 = vunpack.c.l.b16 %v210
    %v931 = vunpack.c.h.b16 %v210
    %v932 = vunpack.c.l.b16 %v211
    %v933 = vunpack.c.h.b16 %v211
    %v934 = vunpack.c.l.b16 %v212
    %v935 = vunpack.c.h.b16 %v212
    %v936 = vunpack.c.l.b16 %v213
    %v937 = vunpack.c.h.b16 %v213
    %v938 = vunpack.c.l.b16 %v214
    %v939 = vunpack.c.h.b16 %v214
    %v940 = vunpack.c.l.b16 %v215
    %v941 = vunpack.c.h.b16 %v215
    %v942 = vunpack.c.l.b16 %v216
    %v943 = vunpack.c.h.b16 %v216
    %v944 = vunpack.c.l.b16 %v217
    %v945 = vunpack.c.h.b16 %v217
    %v946 = vunpack.c.l.b16 %v218
    %v947 = vunpack.c.h.b16 %v218
    %v948 = vunpack.c.l.b16 %v219
    %v949 = vunpack.c.h.b16 %v219
    %v950 = vunpack.c.l.b16 %v220
    %v951 = vunpack.c.h.b16 %v220
    %v952 = vunpack.c.l.b16 %v221
    %v953 = vunpack.c.h.b16 %v221
    %v954 = vunpack.c.l.b16 %v222
    %v955 = vunpack.c.h.b16 %v222
    %v956 = vunpack.c.l.b16 %v223
    %v957 = vunpack.c.h.b16 %v223
    %v958 = vunpack.c.l.b16 %v224
    %v959 = vunpack.c.h.b16 %v224
    %v960 = vunpack.c.l.b16 %v225
    %v961 = vunpack.c.h.b16 %v225
    %v962 = vunpack.c.l.b16 %v226
    %v963 = vunpack.c.h.b16 %v226
    %v964 = vunpack.c.l.b16 %v227
    %v965 = vunpack.c.h.b16 %v227
    %v966 = vunpack.c.l.b16 %v228
    %v967 = vunpack.c.h.b16 %v228
    %v968 = vunpack.c.l.b16 %v229
    %v969 = vunpack.c.h.b16 %v229
    %v970 = vunpack.c.l.b16 %v230
    %v971 = vunpack.c.h.b16 %v230
    %v972 = vunpack.c.l.b16 %v231
    %v973 = vunpack.c.h.b16 %v231
    %v974 = vunpack.c.l.b16 %v232
    %v975 = vunpack.c.h.b16 %v232
    %v976 = vunpack.c.l.b16 %v233
    %v977 = vunpack.c.h.b16 %v233
    %v978 = vunpack.c.l.b16 %v234
    %v979 = vunpack.c.h.b16 %v234
    %v980 = vunpack.c.l.b16 %v235
    %v981 = vunpack.c.h.b16 %v235
    %v982 = vunpack.c.l.b16 %v236
    %v983 = vunpack.c.h.b16 %v236
    %v984 = vunpack.c.l.b16 %v237
    %v985 = vunpack.c.h.b16 %v237
    %v986 = vunpack.c.l.b16 %v238
    %v987 = vunpack.c.h.b16 %v238
    %v988 = vunpack.c.l.b16 %v239
    %v989 = vunpack.c.h.b16 %v239
    %v990 = vunpack.c.l.b16 %v240
    %v991 = vunpack.c.h.b16 %v240
    %v992 = vunpack.c.l.b16 %v241
    %v993 = vunpack.c.h.b16 %v241
    %v994 = vunpack.c.l.b16 %v242
    %v995 = vunpack.c.h.b16 %v242
    %v996 = vunpack.c.l.b16 %v243
    %v997 = vunpack.c.h.b16 %v243
    %v998 = vunpack.c.l.b16 %v244
    %v999 = vunpack.c.h.b16 %v244
    %v1000 = vunpack.c.l.b16 %v245
    %v1001 = vunpack.c.h.b16 %v245
    %v1002 = vunpack.c.l.b16 %v246
    %v1003 = vunpack.c.h.b16 %v246
    %v1004 = vunpack.c.l.b16 %v247
    %v1005 = vunpack.c.h.b16 %v247
    %v1006 = vunpack.c.l.b16 %v248
    %v1007 = vunpack.c.h.b16 %v248
    %v1008 = vunpack.c.l.b16 %v249
    %v1009 = vunpack.c.h.b16 %v249
    %v1010 = vunpack.c.l.b16 %v250
    %v1011 = vunpack.c.h.b16 %v250
    %v1012 = vunpack.c.l.b16 %v251
    %v1013 = vunpack.c.h.b16 %v251
    %v1014 = vunpack.c.l.b16 %v252
    %v1015 = vunpack.c.h.b16 %v252
    %v1016 = vunpack.c.l.b16 %v253
    %v1017 = vunpack.c.h.b16 %v253
    %v1018 = vunpack.c.l.b16 %v254
    %v1019 = vunpack.c.h.b16 %v254
    %v1020 = vunpack.c.l.b16 %v255
    %v1021 = vunpack.c.h.b16 %v255
    %v1022 = vunpack.c.l.b16 %v256
    %v1023 = vunpack.c.h.b16 %v256
    %v1024 = vunpack.c.l.b16 %v257
    %v1025 = vunpack.c.h.b16 %v257
    %v1026 = vunpack.c.l.b16 %v258
    %v1027 = vunpack.c.h.b16 %v258
    %v1028 = vunpack.c.l.b16 %v259
    %v1029 = vunpack.c.h.b16 %v259
    %v1030 = vunpack.c.l.b16 %v260
    %v1031 = vunpack.c.h.b16 %v260
    %v1032 = vunpack.c.l.b16 %v261
    %v1033 = vunpack.c.h.b16 %v261
    %v1034 = vunpack.c.l.b16 %v262
    %v1035 = vunpack.c.h.b16 %v262
    %v1036 = vunpack.c.l.b16 %v263
    %v1037 = vunpack.c.h.b16 %v263
    %v1038 = vunpack.c.l.b16 %v264
    %v1039 = vunpack.c.h.b16 %v264
    %v1040 = vunpack.c.l.b16 %v265
    %v1041 = vunpack.c.h.b16 %v265
    %v1042 = vunpack.c.l.b16 %v266
    %v1043 = vunpack.c.h.b16 %v266
    %v1044 = vunpack.c.l.b16 %v267
    %v1045 = vunpack.c.h.b16 %v267
    %v1046 = vunpack.c.l.b16 %v268
    %v1047 = vunpack.c.h.b16 %v268
    %v1048 = vunpack.c.l.b16 %v269
    %v1049 = vunpack.c.h.b16 %v269
    %v1050 = vunpack.c.l.b16 %v270
    %v1051 = vunpack.c.h.b16 %v270
    %v1052 = vunpack.c.l.b16 %v271
    %v1053 = vunpack.c.h.b16 %v271
    %v1054 = vunpack.c.l.b16 %v272
    %v1055 = vunpack.c.h.b16 %v272
    %v1056 = vunpack.c.l.b16 %v273
    %v1057 = vunpack.c.h.b16 %v273
    %v1058 = vunpack.c.l.b16 %v274
    %v1059 = vunpack.c.h.b16 %v274
    %v1060 = vunpack.c.l.b16 %v275
    %v1061 = vunpack.c.h.b16 %v275
    %v1062 = vunpack.c.l.b16 %v276
    %v1063 = vunpack.c.h.b16 %v276
    %v1064 = vunpack.c.l.b16 %v277
    %v1065 = vunpack.c.h.b16 %v277
    %v1066 = vunpack.c.l.b16 %v278
    %v1067 = vunpack.c.h.b16 %v278
    %v1068 = vunpack.c.l.b16 %v279
    %v1069 = vunpack.c.h.b16 %v279
    %v1070 = vunpack.c.l.b16 %v280
    %v1071 = vunpack.c.h.b16 %v280
    %v1072 = vunpack.c.l.b16 %v281
    %v1073 = vunpack.c.h.b16 %v281
    %v1074 = vunpack.c.l.b16 %v282
    %v1075 = vunpack.c.h.b16 %v282
    %v1076 = vunpack.c.l.b16 %v283
    %v1077 = vunpack.c.h.b16 %v283
    %v1078 = vunpack.c.l.b16 %v284
    %v1079 = vunpack.c.h.b16 %v284
    %v1080 = vunpack.c.l.b16 %v285
    %v1081 = vunpack.c.h.b16 %v285
    %v1082 = vunpack.c.l.b16 %v286
    %v1083 = vunpack.c.h.b16 %v286
    %v1084 = vunpack.c.l.b16 %v287
    %v1085 = vunpack.c.h.b16 %v287
    %v1086 = vunpack.c.l.b16 %v288
    %v1087 = vunpack.c.h.b16 %v288
    %v1088 = vunpack.c.l.b16 %v289
    %v1089 = vunpack.c.h.b16 %v289
    %v1090 = vunpack.c.l.b16 %v290
    %v1091 = vunpack.c.h.b16 %v290
    %v1092 = vunpack.c.l.b16 %v291
    %v1093 = vunpack.c.h.b16 %v291
    %v1094 = vunpack.c.l.b16 %v292
    %v1095 = vunpack.c.h.b16 %v292
    %v1096 = vunpack.c.l.b16 %v293
    %v1097 = vunpack.c.h.b16 %v293
    %v1098 = vunpack.c.l.b16 %v294
    %v1099 = vunpack.c.h.b16 %v294
    %v1100 = vunpack.c.l.b16 %v295
    %v1101 = vunpack.c.h.b16 %v295
    %v1102 = vunpack.c.l.b16 %v296
    %v1103 = vunpack.c.h.b16 %v296
    %v1104 = vunpack.c.l.b16 %v297
    %v1105 = vunpack.c.h.b16 %v297
    %v1106 = vunpack.c.l.b16 %v298
    %v1107 = vunpack.c.h.b16 %v298
    %v1108 = vunpack.c.l.b16 %v299
    %v1109 = vunpack.c.h.b16 %v299
    %v1110 = vunpack.c.l.b16 %v300
    %v1111 = vunpack.c.h.b16 %v300
    %v1112 = vunpack.c.l.b16 %v301
    %v1113 = vunpack.c.h.b16 %v301
    %v1114 = vunpack.c.l.b16 %v302
    %v1115 = vunpack.c.h.b16 %v302
    %v1116 = vunpack.c.l.b16 %v303
    %v1117 = vunpack.c.h.b16 %v303
    %v1118 = vunpack.c.l.b16 %v304
    %v1119 = vunpack.c.h.b16 %v304
    %v1120 = vunpack.c.l.b16 %v305
    %v1121 = vunpack.c.h.b16 %v305
    %v1122 = vunpack.c.l.b16 %v306
    %v1123 = vunpack.c.h.b16 %v306
    %v1124 = vunpack.c.l.b16 %v307
    %v1125 = vunpack.c.h.b16 %v307
    %v1126 = vunpack.c.l.b16 %v308
    %v1127 = vunpack.c.h.b16 %v308
    %v1128 = vunpack.c.l.b16 %v309
    %v1129 = vunpack.c.h.b16 %v309
    %v1130 = vunpack.c.l.b16 %v310
    %v1131 = vunpack.c.h.b16 %v310
    %v1132 = vunpack.c.l.b16 %v311
    %v1133 = vunpack.c.h.b16 %v311
    %v1134 = vunpack.c.l.b16 %v312
    %v1135 = vunpack.c.h.b16 %v312
    %v1136 = vunpack.c.l.b16 %v313
    %v1137 = vunpack.c.h.b16 %v313
    %v1138 = vunpack.c.l.b16 %v314
    %v1139 = vunpack.c.h.b16 %v314
    %v1140 = vunpack.c.l.b16 %v315
    %v1141 = vunpack.c.h.b16 %v315
    %v1142 = vunpack.c.l.b16 %v316
    %v1143 = vunpack.c.h.b16 %v316
    %v1144 = vunpack.c.l.b16 %v317
    %v1145 = vunpack.c.h.b16 %v317
    %v1146 = vunpack.c.l.b16 %v318
    %v1147 = vunpack.c.h.b16 %v318
    %v1148 = vunpack.c.l.b16 %v319
    %v1149 = vunpack.c.h.b16 %v319
    %v1150 = vpack.c.b16 %v642, %v638
    %v1151 = vpack.c.b16 %v643, %v639
    %v1152 = vpack.c.b16 %v644, %v640
    %v1153 = vpack.c.b16 %v645, %v641
    %v1154 = vpack.c.b16 %v650, %v646
    %v1155 = vpack.c.b16 %v651, %v647
    %v1156 = vpack.c.b16 %v652, %v648
    %v1157 = vpack.c.b16 %v653, %v649
    %v1158 = vpack.c.b16 %v658, %v654
    %v1159 = vpack.c.b16 %v659, %v655
    %v1160 = vpack.c.b16 %v660, %v656
    %v1161 = vpack.c.b16 %v661, %v657
    %v1162 = vpack.c.b16 %v666, %v662
    %v1163 = vpack.c.b16 %v667, %v663
    %v1164 = vpack.c.b16 %v668, %v664
    %v1165 = vpack.c.b16 %v669, %v665
    %v1166 = vpack.c.b16 %v674, %v670
    %v1167 = vpack.c.b16 %v675, %v671
    %v1168 = vpack.c.b16 %v676, %v672
    %v1169 = vpack.c.b16 %v677, %v673
    %v1170 = vpack.c.b16 %v682, %v678
    %v1171 = vpack.c.b16 %v683, %v679
    %v1172 = vpack.c.b16 %v684, %v680
    %v1173 = vpack.c.b16 %v685, %v681
    %v1174 = vpack.c.b16 %v690, %v686
    %v1175 = vpack.c.b16 %v691, %v687
    %v1176 = vpack.c.b16 %v692, %v688
    %v1177 = vpack.c.b16 %v693, %v689
    %v1178 = vpack.c.b16 %v698, %v694
    %v1179 = vpack.c.b16 %v699, %v695
    %v1180 = vpack.c.b16 %v700, %v696
    %v1181 = vpack.c.b16 %v701, %v697
    %v1182 = vpack.c.b16 %v706, %v702
    %v1183 = vpack.c.b16 %v707, %v703
    %v1184 = vpack.c.b16 %v708, %v704
    %v1185 = vpack.c.b16 %v709, %v705
    %v1186 = vpack.c.b16 %v714, %v710
    %v1187 = vpack.c.b16 %v715, %v711
    %v1188 = vpack.c.b16 %v716, %v712
    %v1189 = vpack.c.b16 %v717, %v713
    %v1190 = vpack.c.b16 %v722, %v718
    %v1191 = vpack.c.b16 %v723, %v719
    %v1192 = vpack.c.b16 %v724, %v720
    %v1193 = vpack.c.b16 %v725, %v721
    %v1194 = vpack.c.b16 %v730, %v726
    %v1195 = vpack.c.b16 %v731, %v727
    %v1196 = vpack.c.b16 %v732, %v728
    %v1197 = vpack.c.b16 %v733, %v729
    %v1198 = vpack.c.b16 %v738, %v734
    %v1199 = vpack.c.b16 %v739, %v735
    %v1200 = vpack.c.b16 %v740, %v736
    %v1201 = vpack.c.b16 %v741, %v737
    %v1202 = vpack.c.b16 %v746, %v742
    %v1203 = vpack.c.b16 %v747, %v743
    %v1204 = vpack.c.b16 %v748, %v744
    %v1205 = vpack.c.b16 %v749, %v745
    %v1206 = vpack.c.b16 %v754, %v750
    %v1207 = vpack.c.b16 %v755, %v751
    %v1208 = vpack.c.b16 %v756, %v752
    %v1209 = vpack.c.b16 %v757, %v753
    %v1210 = vpack.c.b16 %v762, %v758
    %v1211 = vpack.c.b16 %v763, %v759
    %v1212 = vpack.c.b16 %v764, %v760
    %v1213 = vpack.c.b16 %v765, %v761
    %v1214 = vpack.c.b16 %v770, %v766
    %v1215 = vpack.c.b16 %v771, %v767
    %v1216 = vpack.c.b16 %v772, %v768
    %v1217 = vpack.c.b16 %v773, %v769
    %v1218 = vpack.c.b16 %v778, %v774
    %v1219 = vpack.c.b16 %v779, %v775
    %v1220 = vpack.c.b16 %v780, %v776
    %v1221 = vpack.c.b16 %v781, %v777
    %v1222 = vpack.c.b16 %v786, %v782
    %v1223 = vpack.c.b16 %v787, %v783
    %v1224 = vpack.c.b16 %v788, %v784
    %v1225 = vpack.c.b16 %v789, %v785
    %v1226 = vpack.c.b16 %v794, %v790
    %v1227 = vpack.c.b16 %v795, %v791
    %v1228 = vpack.c.b16 %v796, %v792
    %v1229 = vpack.c.b16 %v797, %v793
    %v1230 = vpack.c.b16 %v802, %v798
    %v1231 = vpack.c.b16 %v803, %v799
    %v1232 = vpack.c.b16 %v804, %v800
    %v1233 = vpack.c.b16 %v805, %v801
    %v1234 = vpack.c.b16 %v810, %v806
    %v1235 = vpack.c.b16 %v811, %v807
    %v1236 = vpack.c.b16 %v812, %v808
    %v1237 = vpack.c.b16 %v813, %v809
    %v1238 = vpack.c.b16 %v818, %v814
    %v1239 = vpack.c.b16 %v819, %v815
    %v1240 = vpack.c.b16 %v820, %v816
    %v1241 = vpack.c.b16 %v821, %v817
    %v1242 = vpack.c.b16 %v826, %v822
    %v1243 = vpack.c.b16 %v827, %v823
    %v1244 = vpack.c.b16 %v828, %v824
    %v1245 = vpack.c.b16 %v829, %v825
    %v1246 = vpack.c.b16 %v834, %v830
    %v1247 = vpack.c.b16 %v835, %v831
    %v1248 = vpack.c.b16 %v836, %v832
    %v1249 = vpack.c.b16 %v837, %v833
    %v1250 = vpack.c.b16 %v842, %v838
    %v1251 = vpack.c.b16 %v843, %v839
    %v1252 = vpack.c.b16 %v844, %v840
    %v1253 = vpack.c.b16 %v845, %v841
    %v1254 = vpack.c.b16 %v850, %v846
    %v1255 = vpack.c.b16 %v851, %v847
    %v1256 = vpack.c.b16 %v852, %v848
    %v1257 = vpack.c.b16 %v853, %v849
    %v1258 = vpack.c.b16 %v858, %v854
    %v1259 = vpack.c.b16 %v859, %v855
    %v1260 = vpack.c.b16 %v860, %v856
    %v1261 = vpack.c.b16 %v861, %v857
    %v1262 = vpack.c.b16 %v866, %v862
    %v1263 = vpack.c.b16 %v867, %v863
    %v1264 = vpack.c.b16 %v868, %v864
    %v1265 = vpack.c.b16 %v869, %v865
    %v1266 = vpack.c.b16 %v874, %v870
    %v1267 = vpack.c.b16 %v875, %v871
    %v1268 = vpack.c.b16 %v876, %v872
    %v1269 = vpack.c.b16 %v877, %v873
    %v1270 = vpack.c.b16 %v882, %v878
    %v1271 = vpack.c.b16 %v883, %v879
    %v1272 = vpack.c.b16 %v884, %v880
    %v1273 = vpack.c.b16 %v885, %v881
    %v1274 = vpack.c.b16 %v890, %v886
    %v1275 = vpack.c.b16 %v891, %v887
    %v1276 = vpack.c.b16 %v892, %v888
    %v1277 = vpack.c.b16 %v893, %v889
    %v1278 = vpack.c.b16 %v898, %v894
    %v1279 = vpack.c.b16 %v899, %v895
    %v1280 = vpack.c.b16 %v900, %v896
    %v1281 = vpack.c.b16 %v901, %v897
    %v1282 = vpack.c.b16 %v906, %v902
    %v1283 = vpack.c.b16 %v907, %v903
    %v1284 = vpack.c.b16 %v908, %v904
    %v1285 = vpack.c.b16 %v909, %v905
    %v1286 = vpack.c.b16 %v914, %v910
    %v1287 = vpack.c.b16 %v915, %v911
    %v1288 = vpack.c.b16 %v916, %v912
    %v1289 = vpack.c.b16 %v917, %v913
    %v1290 = vpack.c.b16 %v922, %v918
    %v1291 = vpack.c.b16 %v923, %v919
    %v1292 = vpack.c.b16 %v924, %v920
    %v1293 = vpack.c.b16 %v925, %v921
    %v1294 = vpack.c.b16 %v930, %v926
    %v1295 = vpack.c.b16 %v931, %v927
    %v1296 = vpack.c.b16 %v932, %v928
    %v1297 = vpack.c.b16 %v933, %v929
    %v1298 = vpack.c.b16 %v938, %v934
    %v1299 = vpack.c.b16 %v939, %v935
    %v1300 = vpack.c.b16 %v940, %v936
    %v1301 = vpack.c.b16 %v941, %v937
    %v1302 = vpack.c.b16 %v946, %v942
    %v1303 = vpack.c.b16 %v947, %v943
    %v1304 = vpack.c.b16 %v948, %v944
    %v1305 = vpack.c.b16 %v949, %v945
    %v1306 = vpack.c.b16 %v954, %v950
    %v1307 = vpack.c.b16 %v955, %v951
    %v1308 = vpack.c.b16 %v956, %v952
    %v1309 = vpack.c.b16 %v957, %v953
    %v1310 = vpack.c.b16 %v962, %v958
    %v1311 = vpack.c.b16 %v963, %v959
    %v1312 = vpack.c.b16 %v964, %v960
    %v1313 = vpack.c.b16 %v965, %v961
    %v1314 = vpack.c.b16 %v970, %v966
    %v1315 = vpack.c.b16 %v971, %v967
    %v1316 = vpack.c.b16 %v972, %v968
    %v1317 = vpack.c.b16 %v973, %v969
    %v1318 = vpack.c.b16 %v978, %v974
    %v1319 = vpack.c.b16 %v979, %v975
    %v1320 = vpack.c.b16 %v980, %v976
    %v1321 = vpack.c.b16 %v981, %v977
    %v1322 = vpack.c.b16 %v986, %v982
    %v1323 = vpack.c.b16 %v987, %v983
    %v1324 = vpack.c.b16 %v988, %v984
    %v1325 = vpack.c.b16 %v989, %v985
    %v1326 = vpack.c.b16 %v994, %v990
    %v1327 = vpack.c.b16 %v995, %v991
    %v1328 = vpack.c.b16 %v996, %v992
    %v1329 = vpack.c.b16 %v997, %v993
    %v1330 = vpack.c.b16 %v1002, %v998
    %v1331 = vpack.c.b16 %v1003, %v999
    %v1332 = vpack.c.b16 %v1004, %v1000
    %v1333 = vpack.c.b16 %v1005, %v1001
    %v1334 = vpack.c.b16 %v1010, %v1006
    %v1335 = vpack.c.b16 %v1011, %v1007
    %v1336 = vpack.c.b16 %v1012, %v1008
    %v1337 = vpack.c.b16 %v1013, %v1009
    %v1338 = vpack.c.b16 %v1018, %v1014
    %v1339 = vpack.c.b16 %v1019, %v1015
    %v1340 = vpack.c.b16 %v1020, %v1016
    %v1341 = vpack.c.b16 %v1021, %v1017
    %v1342 = vpack.c.b16 %v1026, %v1022
    %v1343 = vpack.c.b16 %v1027, %v1023
    %v1344 = vpack.c.b16 %v1028, %v1024
    %v1345 = vpack.c.b16 %v1029, %v1025
    %v1346 = vpack.c.b16 %v1034, %v1030
    %v1347 = vpack.c.b16 %v1035, %v1031
    %v1348 = vpack.c.b16 %v1036, %v1032
    %v1349 = vpack.c.b16 %v1037, %v1033
    %v1350 = vpack.c.b16 %v1042, %v1038
    %v1351 = vpack.c.b16 %v1043, %v1039
    %v1352 = vpack.c.b16 %v1044, %v1040
    %v1353 = vpack.c.b16 %v1045, %v1041
    %v1354 = vpack.c.b16 %v1050, %v1046
    %v1355 = vpack.c.b16 %v1051, %v1047
    %v1356 = vpack.c.b16 %v1052, %v1048
    %v1357 = vpack.c.b16 %v1053, %v1049
    %v1358 = vpack.c.b16 %v1058, %v1054
    %v1359 = vpack.c.b16 %v1059, %v1055
    %v1360 = vpack.c.b16 %v1060, %v1056
    %v1361 = vpack.c.b16 %v1061, %v1057
    %v1362 = vpack.c.b16 %v1066, %v1062
    %v1363 = vpack.c.b16 %v1067, %v1063
    %v1364 = vpack.c.b16 %v1068, %v1064
    %v1365 = vpack.c.b16 %v1069, %v1065
    %v1366 = vpack.c.b16 %v1074, %v1070
    %v1367 = vpack.c.b16 %v1075, %v1071
    %v1368 = vpack.c.b16 %v1076, %v1072
    %v1369 = vpack.c.b16 %v1077, %v1073
    %v1370 = vpack.c.b16 %v1082, %v1078
    %v1371 = vpack.c.b16 %v1083, %v1079
    %v1372 = vpack.c.b16 %v1084, %v1080
    %v1373 = vpack.c.b16 %v1085, %v1081
    %v1374 = vpack.c.b16 %v1090, %v1086
    %v1375 = vpack.c.b16 %v1091, %v1087
    %v1376 = vpack.c.b16 %v1092, %v1088
    %v1377 = vpack.c.b16 %v1093, %v1089
    %v1378 = vpack.c.b16 %v1098, %v1094
    %v1379 = vpack.c.b16 %v1099, %v1095
    %v1380 = vpack.c.b16 %v1100, %v1096
    %v1381 = vpack.c.b16 %v1101, %v1097
    %v1382 = vpack.c.b16 %v1106, %v1102
    %v1383 = vpack.c.b16 %v1107, %v1103
    %v1384 = vpack.c.b16 %v1108, %v1104
    %v1385 = vpack.c.b16 %v1109, %v1105
    %v1386 = vpack.c.b16 %v1114, %v1110
    %v1387 = vpack.c.b16 %v1115, %v1111
    %v1388 = vpack.c.b16 %v1116, %v1112
    %v1389 = vpack.c.b16 %v1117, %v1113
    %v1390 = vpack.c.b16 %v1122, %v1118
    %v1391 = vpack.c.b16 %v1123, %v1119
    %v1392 = vpack.c.b16 %v1124, %v1120
    %v1393 = vpack.c.b16 %v1125, %v1121
    %v1394 = vpack.c.b16 %v1130, %v1126
    %v1395 = vpack.c.b16 %v1131, %v1127
    %v1396 = vpack.c.b16 %v1132, %v1128
    %v1397 = vpack.c.b16 %v1133, %v1129
    %v1398 = vpack.c.b16 %v1138, %v1134
    %v1399 = vpack.c.b16 %v1139, %v1135
    %v1400 = vpack.c.b16 %v1140, %v1136
    %v1401 = vpack.c.b16 %v1141, %v1137
    %v1402 = vpack.c.b16 %v1146, %v1142
    %v1403 = vpack.c.b16 %v1147, %v1143
    %v1404 = vpack.c.b16 %v1148, %v1144
    %v1405 = vpack.c.b16 %v1149, %v1145
    %1662 = vmatprep.subr.bf16.mxu0 %v1151
    %1663 = vmatpush1.bf16.msra.mxu0 %v1150
    %1664 = vmatprep.subr.bf16.mxu0 %v1155
    %1665 = vmatpush1.bf16.msra.mxu0 %v1154
    %1666 = vmatprep.subr.bf16.mxu0 %v1159
    %1667 = vmatpush1.bf16.msra.mxu0 %v1158
    %1668 = vmatprep.subr.bf16.mxu0 %v1163
    %1669 = vmatpush1.bf16.msra.mxu0 %v1162
    %1670 = vmatprep.subr.bf16.mxu0 %v1167
    %1671 = vmatpush1.bf16.msra.mxu0 %v1166
    %1672 = vmatprep.subr.bf16.mxu0 %v1171
    %1673 = vmatpush1.bf16.msra.mxu0 %v1170
    %1674 = vmatprep.subr.bf16.mxu0 %v1175
    %1675 = vmatpush1.bf16.msra.mxu0 %v1174
    %1676 = vmatprep.subr.bf16.mxu0 %v1179
    %1677 = vmatpush1.bf16.msra.mxu0 %v1178
    %1678 = vmatprep.subr.bf16.mxu0 %v1183
    %1679 = vmatpush1.bf16.msra.mxu0 %v1182
    %1680 = vmatprep.subr.bf16.mxu0 %v1187
    %1681 = vmatpush1.bf16.msra.mxu0 %v1186
    %1682 = vmatprep.subr.bf16.mxu0 %v1191
    %1683 = vmatpush1.bf16.msra.mxu0 %v1190
    %1684 = vmatprep.subr.bf16.mxu0 %v1195
    %1685 = vmatpush1.bf16.msra.mxu0 %v1194
    %1686 = vmatprep.subr.bf16.mxu0 %v1199
    %1687 = vmatpush1.bf16.msra.mxu0 %v1198
    %1688 = vmatprep.subr.bf16.mxu0 %v1203
    %1689 = vmatpush1.bf16.msra.mxu0 %v1202
    %1690 = vmatprep.subr.bf16.mxu0 %v1207
    %1691 = vmatpush1.bf16.msra.mxu0 %v1206
    %1692 = vmatprep.subr.bf16.mxu0 %v1211
    %1693 = vmatpush1.bf16.msra.mxu0 %v1210
    %1694 = vmatprep.mubr.bf16.mxu0 %v367
    %1695 = vmatmul.mubr.bf16.gmra.mrb[0].mxu0 %v366
    %v1696 = vpop.f32.mrb[0].mxu0
    %v1697 = vadd.f32 %v325, %v1696
    %v1698 = vpop.f32.mrb[0].mxu0
    %v1699 = vadd.f32 %v329, %v1698
    %v1700 = vpop.f32.mrb[0].mxu0
    %v1701 = vadd.f32 %v325, %v1700
    %v1702 = vpop.f32.mrb[0].mxu0
    %v1703 = vadd.f32 %v329, %v1702
    %1704 = vdwg.mxu0
    %1705 = vmatprep.subr.bf16.mxu0 %v1215
    %1706 = vmatpush1.bf16.msra.mxu0 %v1214
    %1707 = vmatprep.subr.bf16.mxu0 %v1219
    %1708 = vmatpush1.bf16.msra.mxu0 %v1218
    %1709 = vmatprep.subr.bf16.mxu0 %v1223
    %1710 = vmatpush1.bf16.msra.mxu0 %v1222
    %1711 = vmatprep.subr.bf16.mxu0 %v1227
    %1712 = vmatpush1.bf16.msra.mxu0 %v1226
    %1713 = vmatprep.subr.bf16.mxu0 %v1231
    %1714 = vmatpush1.bf16.msra.mxu0 %v1230
    %1715 = vmatprep.subr.bf16.mxu0 %v1235
    %1716 = vmatpush1.bf16.msra.mxu0 %v1234
    %1717 = vmatprep.subr.bf16.mxu0 %v1239
    %1718 = vmatpush1.bf16.msra.mxu0 %v1238
    %1719 = vmatprep.subr.bf16.mxu0 %v1243
    %1720 = vmatpush1.bf16.msra.mxu0 %v1242
    %1721 = vmatprep.subr.bf16.mxu0 %v1247
    %1722 = vmatpush1.bf16.msra.mxu0 %v1246
    %1723 = vmatprep.subr.bf16.mxu0 %v1251
    %1724 = vmatpush1.bf16.msra.mxu0 %v1250
    %1725 = vmatprep.subr.bf16.mxu0 %v1255
    %1726 = vmatpush1.bf16.msra.mxu0 %v1254
    %1727 = vmatprep.subr.bf16.mxu0 %v1259
    %1728 = vmatpush1.bf16.msra.mxu0 %v1258
    %1729 = vmatprep.subr.bf16.mxu0 %v1263
    %1730 = vmatpush1.bf16.msra.mxu0 %v1262
    %1731 = vmatprep.subr.bf16.mxu0 %v1267
    %1732 = vmatpush1.bf16.msra.mxu0 %v1266
    %1733 = vmatprep.subr.bf16.mxu0 %v1271
    %1734 = vmatpush1.bf16.msra.mxu0 %v1270
    %1735 = vmatprep.subr.bf16.mxu0 %v1275
    %1736 = vmatpush1.bf16.msra.mxu0 %v1274
    %1737 = vmatprep.mubr.bf16.mxu0 %v369
    %1738 = vmatmul.mubr.bf16.gmra.mrb[0].mxu0 %v368
    %v1739 = vpop.f32.mrb[0].mxu0
    %v1740 = vadd.f32 %v1697, %v1739
    %v1741 = vpop.f32.mrb[0].mxu0
    %v1742 = vadd.f32 %v1699, %v1741
    %v1743 = vpop.f32.mrb[0].mxu0
    %v1744 = vadd.f32 %v1701, %v1743
    %v1745 = vpop.f32.mrb[0].mxu0
    %v1746 = vadd.f32 %v1703, %v1745
    %1747 = vdwg.mxu0
    %1748 = vmatprep.subr.bf16.mxu0 %v1279
    %1749 = vmatpush1.bf16.msra.mxu0 %v1278
    %1750 = vmatprep.subr.bf16.mxu0 %v1283
    %1751 = vmatpush1.bf16.msra.mxu0 %v1282
    %1752 = vmatprep.subr.bf16.mxu0 %v1287
    %1753 = vmatpush1.bf16.msra.mxu0 %v1286
    %1754 = vmatprep.subr.bf16.mxu0 %v1291
    %1755 = vmatpush1.bf16.msra.mxu0 %v1290
    %1756 = vmatprep.subr.bf16.mxu0 %v1295
    %1757 = vmatpush1.bf16.msra.mxu0 %v1294
    %1758 = vmatprep.subr.bf16.mxu0 %v1299
    %1759 = vmatpush1.bf16.msra.mxu0 %v1298
    %1760 = vmatprep.subr.bf16.mxu0 %v1303
    %1761 = vmatpush1.bf16.msra.mxu0 %v1302
    %1762 = vmatprep.subr.bf16.mxu0 %v1307
    %1763 = vmatpush1.bf16.msra.mxu0 %v1306
    %1764 = vmatprep.subr.bf16.mxu0 %v1311
    %1765 = vmatpush1.bf16.msra.mxu0 %v1310
    %1766 = vmatprep.subr.bf16.mxu0 %v1315
    %1767 = vmatpush1.bf16.msra.mxu0 %v1314
    %1768 = vmatprep.subr.bf16.mxu0 %v1319
    %1769 = vmatpush1.bf16.msra.mxu0 %v1318
    %1770 = vmatprep.subr.bf16.mxu0 %v1323
    %1771 = vmatpush1.bf16.msra.mxu0 %v1322
    %1772 = vmatprep.subr.bf16.mxu0 %v1327
    %1773 = vmatpush1.bf16.msra.mxu0 %v1326
    %1774 = vmatprep.subr.bf16.mxu0 %v1331
    %1775 = vmatpush1.bf16.msra.mxu0 %v1330
    %1776 = vmatprep.subr.bf16.mxu0 %v1335
    %1777 = vmatpush1.bf16.msra.mxu0 %v1334
    %1778 = vmatprep.subr.bf16.mxu0 %v1339
    %1779 = vmatpush1.bf16.msra.mxu0 %v1338
    %1780 = vmatprep.mubr.bf16.mxu0 %v371
    %1781 = vmatmul.mubr.bf16.gmra.mrb[0].mxu0 %v370
    %v1782 = vpop.f32.mrb[0].mxu0
    %v1783 = vadd.f32 %v1740, %v1782
    %v1784 = vpop.f32.mrb[0].mxu0
    %v1785 = vadd.f32 %v1742, %v1784
    %v1786 = vpop.f32.mrb[0].mxu0
    %v1787 = vadd.f32 %v1744, %v1786
    %v1788 = vpop.f32.mrb[0].mxu0
    %v1789 = vadd.f32 %v1746, %v1788
    %1790 = vdwg.mxu0
    %1791 = vmatprep.subr.bf16.mxu0 %v1343
    %1792 = vmatpush1.bf16.msra.mxu0 %v1342
    %1793 = vmatprep.subr.bf16.mxu0 %v1347
    %1794 = vmatpush1.bf16.msra.mxu0 %v1346
    %1795 = vmatprep.subr.bf16.mxu0 %v1351
    %1796 = vmatpush1.bf16.msra.mxu0 %v1350
    %1797 = vmatprep.subr.bf16.mxu0 %v1355
    %1798 = vmatpush1.bf16.msra.mxu0 %v1354
    %1799 = vmatprep.subr.bf16.mxu0 %v1359
    %1800 = vmatpush1.bf16.msra.mxu0 %v1358
    %1801 = vmatprep.subr.bf16.mxu0 %v1363
    %1802 = vmatpush1.bf16.msra.mxu0 %v1362
    %1803 = vmatprep.subr.bf16.mxu0 %v1367
    %1804 = vmatpush1.bf16.msra.mxu0 %v1366
    %1805 = vmatprep.subr.bf16.mxu0 %v1371
    %1806 = vmatpush1.bf16.msra.mxu0 %v1370
    %1807 = vmatprep.subr.bf16.mxu0 %v1375
    %1808 = vmatpush1.bf16.msra.mxu0 %v1374
    %1809 = vmatprep.subr.bf16.mxu0 %v1379
    %1810 = vmatpush1.bf16.msra.mxu0 %v1378
    %1811 = vmatprep.subr.bf16.mxu0 %v1383
    %1812 = vmatpush1.bf16.msra.mxu0 %v1382
    %1813 = vmatprep.subr.bf16.mxu0 %v1387
    %1814 = vmatpush1.bf16.msra.mxu0 %v1386
    %1815 = vmatprep.subr.bf16.mxu0 %v1391
    %1816 = vmatpush1.bf16.msra.mxu0 %v1390
    %1817 = vmatprep.subr.bf16.mxu0 %v1395
    %1818 = vmatpush1.bf16.msra.mxu0 %v1394
    %1819 = vmatprep.subr.bf16.mxu0 %v1399
    %1820 = vmatpush1.bf16.msra.mxu0 %v1398
    %1821 = vmatprep.subr.bf16.mxu0 %v1403
    %1822 = vmatpush1.bf16.msra.mxu0 %v1402
    %1823 = vmatprep.mubr.bf16.mxu0 %v373
    %1824 = vmatmul.mubr.bf16.gmra.mrb[0].mxu0 %v372
    %v1825 = vpop.f32.mrb[0].mxu0
    %v1826 = vadd.f32 %v1783, %v1825
    %v1827 = vpop.f32.mrb[0].mxu0
    %v1828 = vadd.f32 %v1785, %v1827
    %v1829 = vpop.f32.mrb[0].mxu0
    %v1830 = vadd.f32 %v1787, %v1829
    %v1831 = vpop.f32.mrb[0].mxu0
    %v1832 = vadd.f32 %v1789, %v1831
    %1833 = vdwg.mxu0
    %1834 = vmatprep.subr.bf16.mxu0 %v1153
    %1835 = vmatpush1.bf16.msra.mxu0 %v1152
    %1836 = vmatprep.subr.bf16.mxu0 %v1157
    %1837 = vmatpush1.bf16.msra.mxu0 %v1156
    %1838 = vmatprep.subr.bf16.mxu0 %v1161
    %1839 = vmatpush1.bf16.msra.mxu0 %v1160
    %1840 = vmatprep.subr.bf16.mxu0 %v1165
    %1841 = vmatpush1.bf16.msra.mxu0 %v1164
    %1842 = vmatprep.subr.bf16.mxu0 %v1169
    %1843 = vmatpush1.bf16.msra.mxu0 %v1168
    %1844 = vmatprep.subr.bf16.mxu0 %v1173
    %1845 = vmatpush1.bf16.msra.mxu0 %v1172
    %1846 = vmatprep.subr.bf16.mxu0 %v1177
    %1847 = vmatpush1.bf16.msra.mxu0 %v1176
    %1848 = vmatprep.subr.bf16.mxu0 %v1181
    %1849 = vmatpush1.bf16.msra.mxu0 %v1180
    %1850 = vmatprep.subr.bf16.mxu0 %v1185
    %1851 = vmatpush1.bf16.msra.mxu0 %v1184
    %1852 = vmatprep.subr.bf16.mxu0 %v1189
    %1853 = vmatpush1.bf16.msra.mxu0 %v1188
    %1854 = vmatprep.subr.bf16.mxu0 %v1193
    %1855 = vmatpush1.bf16.msra.mxu0 %v1192
    %1856 = vmatprep.subr.bf16.mxu0 %v1197
    %1857 = vmatpush1.bf16.msra.mxu0 %v1196
    %1858 = vmatprep.subr.bf16.mxu0 %v1201
    %1859 = vmatpush1.bf16.msra.mxu0 %v1200
    %1860 = vmatprep.subr.bf16.mxu0 %v1205
    %1861 = vmatpush1.bf16.msra.mxu0 %v1204
    %1862 = vmatprep.subr.bf16.mxu0 %v1209
    %1863 = vmatpush1.bf16.msra.mxu0 %v1208
    %1864 = vmatprep.subr.bf16.mxu0 %v1213
    %1865 = vmatpush1.bf16.msra.mxu0 %v1212
    %1866 = vmatprep.mubr.bf16.mxu0 %v367
    %1867 = vmatmul.mubr.bf16.gmra.mrb[0].mxu0 %v366
    %v1868 = vpop.f32.mrb[0].mxu0
    %v1869 = vadd.f32 %v333, %v1868
    %v1870 = vpop.f32.mrb[0].mxu0
    %v1871 = vadd.f32 %v337, %v1870
    %v1872 = vpop.f32.mrb[0].mxu0
    %v1873 = vadd.f32 %v333, %v1872
    %v1874 = vpop.f32.mrb[0].mxu0
    %v1875 = vadd.f32 %v337, %v1874
    %1876 = vdwg.mxu0
    %1877 = vmatprep.subr.bf16.mxu0 %v1217
    %1878 = vmatpush1.bf16.msra.mxu0 %v1216
    %1879 = vmatprep.subr.bf16.mxu0 %v1221
    %1880 = vmatpush1.bf16.msra.mxu0 %v1220
    %1881 = vmatprep.subr.bf16.mxu0 %v1225
    %1882 = vmatpush1.bf16.msra.mxu0 %v1224
    %1883 = vmatprep.subr.bf16.mxu0 %v1229
    %1884 = vmatpush1.bf16.msra.mxu0 %v1228
    %1885 = vmatprep.subr.bf16.mxu0 %v1233
    %1886 = vmatpush1.bf16.msra.mxu0 %v1232
    %1887 = vmatprep.subr.bf16.mxu0 %v1237
    %1888 = vmatpush1.bf16.msra.mxu0 %v1236
    %1889 = vmatprep.subr.bf16.mxu0 %v1241
    %1890 = vmatpush1.bf16.msra.mxu0 %v1240
    %1891 = vmatprep.subr.bf16.mxu0 %v1245
    %1892 = vmatpush1.bf16.msra.mxu0 %v1244
    %1893 = vmatprep.subr.bf16.mxu0 %v1249
    %1894 = vmatpush1.bf16.msra.mxu0 %v1248
    %1895 = vmatprep.subr.bf16.mxu0 %v1253
    %1896 = vmatpush1.bf16.msra.mxu0 %v1252
    %1897 = vmatprep.subr.bf16.mxu0 %v1257
    %1898 = vmatpush1.bf16.msra.mxu0 %v1256
    %1899 = vmatprep.subr.bf16.mxu0 %v1261
    %1900 = vmatpush1.bf16.msra.mxu0 %v1260
    %1901 = vmatprep.subr.bf16.mxu0 %v1265
    %1902 = vmatpush1.bf16.msra.mxu0 %v1264
    %1903 = vmatprep.subr.bf16.mxu0 %v1269
    %1904 = vmatpush1.bf16.msra.mxu0 %v1268
    %1905 = vmatprep.subr.bf16.mxu0 %v1273
    %1906 = vmatpush1.bf16.msra.mxu0 %v1272
    %1907 = vmatprep.subr.bf16.mxu0 %v1277
    %1908 = vmatpush1.bf16.msra.mxu0 %v1276
    %1909 = vmatprep.mubr.bf16.mxu0 %v369
    %1910 = vmatmul.mubr.bf16.gmra.mrb[0].mxu0 %v368
    %v1911 = vpop.f32.mrb[0].mxu0
    %v1912 = vadd.f32 %v1869, %v1911
    %v1913 = vpop.f32.mrb[0].mxu0
    %v1914 = vadd.f32 %v1871, %v1913
    %v1915 = vpop.f32.mrb[0].mxu0
    %v1916 = vadd.f32 %v1873, %v1915
    %v1917 = vpop.f32.mrb[0].mxu0
    %v1918 = vadd.f32 %v1875, %v1917
    %1919 = vdwg.mxu0
    %1920 = vmatprep.subr.bf16.mxu0 %v1281
    %1921 = vmatpush1.bf16.msra.mxu0 %v1280
    %1922 = vmatprep.subr.bf16.mxu0 %v1285
    %1923 = vmatpush1.bf16.msra.mxu0 %v1284
    %1924 = vmatprep.subr.bf16.mxu0 %v1289
    %1925 = vmatpush1.bf16.msra.mxu0 %v1288
    %1926 = vmatprep.subr.bf16.mxu0 %v1293
    %1927 = vmatpush1.bf16.msra.mxu0 %v1292
    %1928 = vmatprep.subr.bf16.mxu0 %v1297
    %1929 = vmatpush1.bf16.msra.mxu0 %v1296
    %1930 = vmatprep.subr.bf16.mxu0 %v1301
    %1931 = vmatpush1.bf16.msra.mxu0 %v1300
    %1932 = vmatprep.subr.bf16.mxu0 %v1305
    %1933 = vmatpush1.bf16.msra.mxu0 %v1304
    %1934 = vmatprep.subr.bf16.mxu0 %v1309
    %1935 = vmatpush1.bf16.msra.mxu0 %v1308
    %1936 = vmatprep.subr.bf16.mxu0 %v1313
    %1937 = vmatpush1.bf16.msra.mxu0 %v1312
    %1938 = vmatprep.subr.bf16.mxu0 %v1317
    %1939 = vmatpush1.bf16.msra.mxu0 %v1316
    %1940 = vmatprep.subr.bf16.mxu0 %v1321
    %1941 = vmatpush1.bf16.msra.mxu0 %v1320
    %1942 = vmatprep.subr.bf16.mxu0 %v1325
    %1943 = vmatpush1.bf16.msra.mxu0 %v1324
    %1944 = vmatprep.subr.bf16.mxu0 %v1329
    %1945 = vmatpush1.bf16.msra.mxu0 %v1328
    %1946 = vmatprep.subr.bf16.mxu0 %v1333
    %1947 = vmatpush1.bf16.msra.mxu0 %v1332
    %1948 = vmatprep.subr.bf16.mxu0 %v1337
    %1949 = vmatpush1.bf16.msra.mxu0 %v1336
    %1950 = vmatprep.subr.bf16.mxu0 %v1341
    %1951 = vmatpush1.bf16.msra.mxu0 %v1340
    %1952 = vmatprep.mubr.bf16.mxu0 %v371
    %1953 = vmatmul.mubr.bf16.gmra.mrb[0].mxu0 %v370
    %v1954 = vpop.f32.mrb[0].mxu0
    %v1955 = vadd.f32 %v1912, %v1954
    %v1956 = vpop.f32.mrb[0].mxu0
    %v1957 = vadd.f32 %v1914, %v1956
    %v1958 = vpop.f32.mrb[0].mxu0
    %v1959 = vadd.f32 %v1916, %v1958
    %v1960 = vpop.f32.mrb[0].mxu0
    %v1961 = vadd.f32 %v1918, %v1960
    %1962 = vdwg.mxu0
    %1963 = vmatprep.subr.bf16.mxu0 %v1345
    %1964 = vmatpush1.bf16.msra.mxu0 %v1344
    %1965 = vmatprep.subr.bf16.mxu0 %v1349
    %1966 = vmatpush1.bf16.msra.mxu0 %v1348
    %1967 = vmatprep.subr.bf16.mxu0 %v1353
    %1968 = vmatpush1.bf16.msra.mxu0 %v1352
    %1969 = vmatprep.subr.bf16.mxu0 %v1357
    %1970 = vmatpush1.bf16.msra.mxu0 %v1356
    %1971 = vmatprep.subr.bf16.mxu0 %v1361
    %1972 = vmatpush1.bf16.msra.mxu0 %v1360
    %1973 = vmatprep.subr.bf16.mxu0 %v1365
    %1974 = vmatpush1.bf16.msra.mxu0 %v1364
    %1975 = vmatprep.subr.bf16.mxu0 %v1369
    %1976 = vmatpush1.bf16.msra.mxu0 %v1368
    %1977 = vmatprep.subr.bf16.mxu0 %v1373
    %1978 = vmatpush1.bf16.msra.mxu0 %v1372
    %1979 = vmatprep.subr.bf16.mxu0 %v1377
    %1980 = vmatpush1.bf16.msra.mxu0 %v1376
    %1981 = vmatprep.subr.bf16.mxu0 %v1381
    %1982 = vmatpush1.bf16.msra.mxu0 %v1380
    %1983 = vmatprep.subr.bf16.mxu0 %v1385
    %1984 = vmatpush1.bf16.msra.mxu0 %v1384
    %1985 = vmatprep.subr.bf16.mxu0 %v1389
    %1986 = vmatpush1.bf16.msra.mxu0 %v1388
    %1987 = vmatprep.subr.bf16.mxu0 %v1393
    %1988 = vmatpush1.bf16.msra.mxu0 %v1392
    %1989 = vmatprep.subr.bf16.mxu0 %v1397
    %1990 = vmatpush1.bf16.msra.mxu0 %v1396
    %1991 = vmatprep.subr.bf16.mxu0 %v1401
    %1992 = vmatpush1.bf16.msra.mxu0 %v1400
    %1993 = vmatprep.subr.bf16.mxu0 %v1405
    %1994 = vmatpush1.bf16.msra.mxu0 %v1404
    %1995 = vmatprep.mubr.bf16.mxu0 %v373
    %1996 = vmatmul.mubr.bf16.gmra.mrb[0].mxu0 %v372
    %v1997 = vpop.f32.mrb[0].mxu0
    %v1998 = vadd.f32 %v1955, %v1997
    %v1999 = vpop.f32.mrb[0].mxu0
    %v2000 = vadd.f32 %v1957, %v1999
    %v2001 = vpop.f32.mrb[0].mxu0
    %v2002 = vadd.f32 %v1959, %v2001
    %v2003 = vpop.f32.mrb[0].mxu0
    %v2004 = vadd.f32 %v1961, %v2003
    %2005 = vdwg.mxu0
    %v2006 = vmax.f32 %v1826, 0.0
    %v2007 = vmax.f32 %v1828, 0.0
    %v2008 = vmax.f32 %v1998, 0.0
    %v2009 = vmax.f32 %v2000, 0.0
    %v2010 = vmax.f32 %v1830, 0.0
    %v2011 = vmax.f32 %v1832, 0.0
    %v2012 = vmax.f32 %v2002, 0.0
    %v2013 = vmax.f32 %v2004, 0.0
    %v2014 = vpack.c.bf16 %v2010, %v2006
    %v2015 = vpack.c.bf16 %v2011, %v2007
    %v2016 = vpack.c.bf16 %v2012, %v2008
    %v2017 = vpack.c.bf16 %v2013, %v2009
    %v2018 = vld [vmem:[#allocation5] sm:$0xff]
    %v2019 = vld [vmem:[#allocation5 + $0x8] sm:$0xff]
    %v2020 = vld [vmem:[#allocation5 + $0x10] sm:$0xff]
    %v2021 = vld [vmem:[#allocation5 + $0x18] sm:$0xff]
    %v2022 = vld [vmem:[#allocation5 + $0x20] sm:$0xff]
    %v2023 = vld [vmem:[#allocation5 + $0x28] sm:$0xff]
    %v2024 = vld [vmem:[#allocation5 + $0x30] sm:$0xff]
    %v2025 = vld [vmem:[#allocation5 + $0x38] sm:$0xff]
    %v2026 = vld [vmem:[#allocation5 + $0x40] sm:$0xff]
    %v2027 = vld [vmem:[#allocation5 + $0x48] sm:$0xff]
    %v2028 = vld [vmem:[#allocation5 + $0x50] sm:$0xff]
    %v2029 = vld [vmem:[#allocation5 + $0x58] sm:$0xff]
    %v2030 = vld [vmem:[#allocation5 + $0x60] sm:$0xff]
    %v2031 = vld [vmem:[#allocation5 + $0x68] sm:$0xff]
    %v2032 = vld [vmem:[#allocation5 + $0x70] sm:$0xff]
    %v2033 = vld [vmem:[#allocation5 + $0x78] sm:$0xff]
    %v2034 = vld [vmem:[#allocation5 + $0x80] sm:$0xff]
    %v2035 = vld [vmem:[#allocation5 + $0x88] sm:$0xff]
    %v2036 = vld [vmem:[#allocation5 + $0x90] sm:$0xff]
    %v2037 = vld [vmem:[#allocation5 + $0x98] sm:$0xff]
    %v2038 = vld [vmem:[#allocation5 + $0xa0] sm:$0xff]
    %v2039 = vld [vmem:[#allocation5 + $0xa8] sm:$0xff]
    %v2040 = vld [vmem:[#allocation5 + $0xb0] sm:$0xff]
    %v2041 = vld [vmem:[#allocation5 + $0xb8] sm:$0xff]
    %v2042 = vld [vmem:[#allocation5 + $0xc0] sm:$0xff]
    %v2043 = vld [vmem:[#allocation5 + $0xc8] sm:$0xff]
    %v2044 = vld [vmem:[#allocation5 + $0xd0] sm:$0xff]
    %v2045 = vld [vmem:[#allocation5 + $0xd8] sm:$0xff]
    %v2046 = vld [vmem:[#allocation5 + $0xe0] sm:$0xff]
    %v2047 = vld [vmem:[#allocation5 + $0xe8] sm:$0xff]
    %v2048 = vld [vmem:[#allocation5 + $0xf0] sm:$0xff]
    %v2049 = vld [vmem:[#allocation5 + $0xf8] sm:$0xff]
    %v2050 = vld [vmem:[#allocation5 + $0x100] sm:$0xff]
    %v2051 = vld [vmem:[#allocation5 + $0x108] sm:$0xff]
    %v2052 = vld [vmem:[#allocation5 + $0x110] sm:$0xff]
    %v2053 = vld [vmem:[#allocation5 + $0x118] sm:$0xff]
    %v2054 = vld [vmem:[#allocation5 + $0x120] sm:$0xff]
    %v2055 = vld [vmem:[#allocation5 + $0x128] sm:$0xff]
    %v2056 = vld [vmem:[#allocation5 + $0x130] sm:$0xff]
    %v2057 = vld [vmem:[#allocation5 + $0x138] sm:$0xff]
    %v2058 = vld [vmem:[#allocation5 + $0x140] sm:$0xff]
    %v2059 = vld [vmem:[#allocation5 + $0x148] sm:$0xff]
    %v2060 = vld [vmem:[#allocation5 + $0x150] sm:$0xff]
    %v2061 = vld [vmem:[#allocation5 + $0x158] sm:$0xff]
    %v2062 = vld [vmem:[#allocation5 + $0x160] sm:$0xff]
    %v2063 = vld [vmem:[#allocation5 + $0x168] sm:$0xff]
    %v2064 = vld [vmem:[#allocation5 + $0x170] sm:$0xff]
    %v2065 = vld [vmem:[#allocation5 + $0x178] sm:$0xff]
    %v2066 = vld [vmem:[#allocation5 + $0x180] sm:$0xff]
    %v2067 = vld [vmem:[#allocation5 + $0x188] sm:$0xff]
    %v2068 = vld [vmem:[#allocation5 + $0x190] sm:$0xff]
    %v2069 = vld [vmem:[#allocation5 + $0x198] sm:$0xff]
    %v2070 = vld [vmem:[#allocation5 + $0x1a0] sm:$0xff]
    %v2071 = vld [vmem:[#allocation5 + $0x1a8] sm:$0xff]
    %v2072 = vld [vmem:[#allocation5 + $0x1b0] sm:$0xff]
    %v2073 = vld [vmem:[#allocation5 + $0x1b8] sm:$0xff]
    %v2074 = vld [vmem:[#allocation5 + $0x1c0] sm:$0xff]
    %v2075 = vld [vmem:[#allocation5 + $0x1c8] sm:$0xff]
    %v2076 = vld [vmem:[#allocation5 + $0x1d0] sm:$0xff]
    %v2077 = vld [vmem:[#allocation5 + $0x1d8] sm:$0xff]
    %v2078 = vld [vmem:[#allocation5 + $0x1e0] sm:$0xff]
    %v2079 = vld [vmem:[#allocation5 + $0x1e8] sm:$0xff]
    %v2080 = vld [vmem:[#allocation5 + $0x1f0] sm:$0xff]
    %v2081 = vld [vmem:[#allocation5 + $0x1f8] sm:$0xff]
    %v2082 = vld [vmem:[#allocation5 + $0x200] sm:$0xff]
    %v2083 = vld [vmem:[#allocation5 + $0x208] sm:$0xff]
    %v2084 = vld [vmem:[#allocation5 + $0x210] sm:$0xff]
    %v2085 = vld [vmem:[#allocation5 + $0x218] sm:$0xff]
    %v2086 = vld [vmem:[#allocation5 + $0x220] sm:$0xff]
    %v2087 = vld [vmem:[#allocation5 + $0x228] sm:$0xff]
    %v2088 = vld [vmem:[#allocation5 + $0x230] sm:$0xff]
    %v2089 = vld [vmem:[#allocation5 + $0x238] sm:$0xff]
    %v2090 = vld [vmem:[#allocation5 + $0x240] sm:$0xff]
    %v2091 = vld [vmem:[#allocation5 + $0x248] sm:$0xff]
    %v2092 = vld [vmem:[#allocation5 + $0x250] sm:$0xff]
    %v2093 = vld [vmem:[#allocation5 + $0x258] sm:$0xff]
    %v2094 = vld [vmem:[#allocation5 + $0x260] sm:$0xff]
    %v2095 = vld [vmem:[#allocation5 + $0x268] sm:$0xff]
    %v2096 = vld [vmem:[#allocation5 + $0x270] sm:$0xff]
    %v2097 = vld [vmem:[#allocation5 + $0x278] sm:$0xff]
    %v2098 = vld [vmem:[#allocation5 + $0x280] sm:$0xff]
    %v2099 = vld [vmem:[#allocation5 + $0x288] sm:$0xff]
    %v2100 = vld [vmem:[#allocation5 + $0x290] sm:$0xff]
    %v2101 = vld [vmem:[#allocation5 + $0x298] sm:$0xff]
    %v2102 = vld [vmem:[#allocation5 + $0x2a0] sm:$0xff]
    %v2103 = vld [vmem:[#allocation5 + $0x2a8] sm:$0xff]
    %v2104 = vld [vmem:[#allocation5 + $0x2b0] sm:$0xff]
    %v2105 = vld [vmem:[#allocation5 + $0x2b8] sm:$0xff]
    %v2106 = vld [vmem:[#allocation5 + $0x2c0] sm:$0xff]
    %v2107 = vld [vmem:[#allocation5 + $0x2c8] sm:$0xff]
    %v2108 = vld [vmem:[#allocation5 + $0x2d0] sm:$0xff]
    %v2109 = vld [vmem:[#allocation5 + $0x2d8] sm:$0xff]
    %v2110 = vld [vmem:[#allocation5 + $0x2e0] sm:$0xff]
    %v2111 = vld [vmem:[#allocation5 + $0x2e8] sm:$0xff]
    %v2112 = vld [vmem:[#allocation5 + $0x2f0] sm:$0xff]
    %v2113 = vld [vmem:[#allocation5 + $0x2f8] sm:$0xff]
    %v2114 = vld [vmem:[#allocation5 + $0x300] sm:$0xff]
    %v2115 = vld [vmem:[#allocation5 + $0x308] sm:$0xff]
    %v2116 = vld [vmem:[#allocation5 + $0x310] sm:$0xff]
    %v2117 = vld [vmem:[#allocation5 + $0x318] sm:$0xff]
    %v2118 = vld [vmem:[#allocation5 + $0x320] sm:$0xff]
    %v2119 = vld [vmem:[#allocation5 + $0x328] sm:$0xff]
    %v2120 = vld [vmem:[#allocation5 + $0x330] sm:$0xff]
    %v2121 = vld [vmem:[#allocation5 + $0x338] sm:$0xff]
    %v2122 = vld [vmem:[#allocation5 + $0x340] sm:$0xff]
    %v2123 = vld [vmem:[#allocation5 + $0x348] sm:$0xff]
    %v2124 = vld [vmem:[#allocation5 + $0x350] sm:$0xff]
    %v2125 = vld [vmem:[#allocation5 + $0x358] sm:$0xff]
    %v2126 = vld [vmem:[#allocation5 + $0x360] sm:$0xff]
    %v2127 = vld [vmem:[#allocation5 + $0x368] sm:$0xff]
    %v2128 = vld [vmem:[#allocation5 + $0x370] sm:$0xff]
    %v2129 = vld [vmem:[#allocation5 + $0x378] sm:$0xff]
    %v2130 = vld [vmem:[#allocation5 + $0x380] sm:$0xff]
    %v2131 = vld [vmem:[#allocation5 + $0x388] sm:$0xff]
    %v2132 = vld [vmem:[#allocation5 + $0x390] sm:$0xff]
    %v2133 = vld [vmem:[#allocation5 + $0x398] sm:$0xff]
    %v2134 = vld [vmem:[#allocation5 + $0x3a0] sm:$0xff]
    %v2135 = vld [vmem:[#allocation5 + $0x3a8] sm:$0xff]
    %v2136 = vld [vmem:[#allocation5 + $0x3b0] sm:$0xff]
    %v2137 = vld [vmem:[#allocation5 + $0x3b8] sm:$0xff]
    %v2138 = vld [vmem:[#allocation5 + $0x3c0] sm:$0xff]
    %v2139 = vld [vmem:[#allocation5 + $0x3c8] sm:$0xff]
    %v2140 = vld [vmem:[#allocation5 + $0x3d0] sm:$0xff]
    %v2141 = vld [vmem:[#allocation5 + $0x3d8] sm:$0xff]
    %v2142 = vld [vmem:[#allocation5 + $0x3e0] sm:$0xff]
    %v2143 = vld [vmem:[#allocation5 + $0x3e8] sm:$0xff]
    %v2144 = vld [vmem:[#allocation5 + $0x3f0] sm:$0xff]
    %v2145 = vld [vmem:[#allocation5 + $0x3f8] sm:$0xff]
    %v2146 = vld [vmem:[%s4] sm:$0xf]
    %v2148 = vlaneseq
    %v2149 = vshrl.u32 %v2148, 7
    %v2150 = vsub.s32 0, %v2149
    %v2151 = vrot.slane %v2146, %v2150
    %v2152 = vlaneseq
    %v2153 = vshrl.u32 %v2152, 7
    %v2154 = vsub.s32 1, %v2153
    %v2155 = vrot.slane %v2146, %v2154
    %v2156 = vlaneseq
    %v2157 = vshrl.u32 %v2156, 7
    %v2158 = vsub.s32 2, %v2157
    %v2159 = vrot.slane %v2146, %v2158
    %v2160 = vlaneseq
    %v2161 = vshrl.u32 %v2160, 7
    %v2162 = vsub.s32 3, %v2161
    %v2163 = vrot.slane %v2146, %v2162
    %v2296 = vunpack.c.l.b16 %v2018
    %v2297 = vunpack.c.h.b16 %v2018
    %v2298 = vunpack.c.l.b16 %v2019
    %v2299 = vunpack.c.h.b16 %v2019
    %v2300 = vunpack.c.l.b16 %v2020
    %v2301 = vunpack.c.h.b16 %v2020
    %v2302 = vunpack.c.l.b16 %v2021
    %v2303 = vunpack.c.h.b16 %v2021
    %v2304 = vunpack.c.l.b16 %v2022
    %v2305 = vunpack.c.h.b16 %v2022
    %v2306 = vunpack.c.l.b16 %v2023
    %v2307 = vunpack.c.h.b16 %v2023
    %v2308 = vunpack.c.l.b16 %v2024
    %v2309 = vunpack.c.h.b16 %v2024
    %v2310 = vunpack.c.l.b16 %v2025
    %v2311 = vunpack.c.h.b16 %v2025
    %v2312 = vunpack.c.l.b16 %v2026
    %v2313 = vunpack.c.h.b16 %v2026
    %v2314 = vunpack.c.l.b16 %v2027
    %v2315 = vunpack.c.h.b16 %v2027
    %v2316 = vunpack.c.l.b16 %v2028
    %v2317 = vunpack.c.h.b16 %v2028
    %v2318 = vunpack.c.l.b16 %v2029
    %v2319 = vunpack.c.h.b16 %v2029
    %v2320 = vunpack.c.l.b16 %v2030
    %v2321 = vunpack.c.h.b16 %v2030
    %v2322 = vunpack.c.l.b16 %v2031
    %v2323 = vunpack.c.h.b16 %v2031
    %v2324 = vunpack.c.l.b16 %v2032
    %v2325 = vunpack.c.h.b16 %v2032
    %v2326 = vunpack.c.l.b16 %v2033
    %v2327 = vunpack.c.h.b16 %v2033
    %v2328 = vunpack.c.l.b16 %v2034
    %v2329 = vunpack.c.h.b16 %v2034
    %v2330 = vunpack.c.l.b16 %v2035
    %v2331 = vunpack.c.h.b16 %v2035
    %v2332 = vunpack.c.l.b16 %v2036
    %v2333 = vunpack.c.h.b16 %v2036
    %v2334 = vunpack.c.l.b16 %v2037
    %v2335 = vunpack.c.h.b16 %v2037
    %v2336 = vunpack.c.l.b16 %v2038
    %v2337 = vunpack.c.h.b16 %v2038
    %v2338 = vunpack.c.l.b16 %v2039
    %v2339 = vunpack.c.h.b16 %v2039
    %v2340 = vunpack.c.l.b16 %v2040
    %v2341 = vunpack.c.h.b16 %v2040
    %v2342 = vunpack.c.l.b16 %v2041
    %v2343 = vunpack.c.h.b16 %v2041
    %v2344 = vunpack.c.l.b16 %v2042
    %v2345 = vunpack.c.h.b16 %v2042
    %v2346 = vunpack.c.l.b16 %v2043
    %v2347 = vunpack.c.h.b16 %v2043
    %v2348 = vunpack.c.l.b16 %v2044
    %v2349 = vunpack.c.h.b16 %v2044
    %v2350 = vunpack.c.l.b16 %v2045
    %v2351 = vunpack.c.h.b16 %v2045
    %v2352 = vunpack.c.l.b16 %v2046
    %v2353 = vunpack.c.h.b16 %v2046
    %v2354 = vunpack.c.l.b16 %v2047
    %v2355 = vunpack.c.h.b16 %v2047
    %v2356 = vunpack.c.l.b16 %v2048
    %v2357 = vunpack.c.h.b16 %v2048
    %v2358 = vunpack.c.l.b16 %v2049
    %v2359 = vunpack.c.h.b16 %v2049
    %v2360 = vunpack.c.l.b16 %v2050
    %v2361 = vunpack.c.h.b16 %v2050
    %v2362 = vunpack.c.l.b16 %v2051
    %v2363 = vunpack.c.h.b16 %v2051
    %v2364 = vunpack.c.l.b16 %v2052
    %v2365 = vunpack.c.h.b16 %v2052
    %v2366 = vunpack.c.l.b16 %v2053
    %v2367 = vunpack.c.h.b16 %v2053
    %v2368 = vunpack.c.l.b16 %v2054
    %v2369 = vunpack.c.h.b16 %v2054
    %v2370 = vunpack.c.l.b16 %v2055
    %v2371 = vunpack.c.h.b16 %v2055
    %v2372 = vunpack.c.l.b16 %v2056
    %v2373 = vunpack.c.h.b16 %v2056
    %v2374 = vunpack.c.l.b16 %v2057
    %v2375 = vunpack.c.h.b16 %v2057
    %v2376 = vunpack.c.l.b16 %v2058
    %v2377 = vunpack.c.h.b16 %v2058
    %v2378 = vunpack.c.l.b16 %v2059
    %v2379 = vunpack.c.h.b16 %v2059
    %v2380 = vunpack.c.l.b16 %v2060
    %v2381 = vunpack.c.h.b16 %v2060
    %v2382 = vunpack.c.l.b16 %v2061
    %v2383 = vunpack.c.h.b16 %v2061
    %v2384 = vunpack.c.l.b16 %v2062
    %v2385 = vunpack.c.h.b16 %v2062
    %v2386 = vunpack.c.l.b16 %v2063
    %v2387 = vunpack.c.h.b16 %v2063
    %v2388 = vunpack.c.l.b16 %v2064
    %v2389 = vunpack.c.h.b16 %v2064
    %v2390 = vunpack.c.l.b16 %v2065
    %v2391 = vunpack.c.h.b16 %v2065
    %v2392 = vunpack.c.l.b16 %v2066
    %v2393 = vunpack.c.h.b16 %v2066
    %v2394 = vunpack.c.l.b16 %v2067
    %v2395 = vunpack.c.h.b16 %v2067
    %v2396 = vunpack.c.l.b16 %v2068
    %v2397 = vunpack.c.h.b16 %v2068
    %v2398 = vunpack.c.l.b16 %v2069
    %v2399 = vunpack.c.h.b16 %v2069
    %v2400 = vunpack.c.l.b16 %v2070
    %v2401 = vunpack.c.h.b16 %v2070
    %v2402 = vunpack.c.l.b16 %v2071
    %v2403 = vunpack.c.h.b16 %v2071
    %v2404 = vunpack.c.l.b16 %v2072
    %v2405 = vunpack.c.h.b16 %v2072
    %v2406 = vunpack.c.l.b16 %v2073
    %v2407 = vunpack.c.h.b16 %v2073
    %v2408 = vunpack.c.l.b16 %v2074
    %v2409 = vunpack.c.h.b16 %v2074
    %v2410 = vunpack.c.l.b16 %v2075
    %v2411 = vunpack.c.h.b16 %v2075
    %v2412 = vunpack.c.l.b16 %v2076
    %v2413 = vunpack.c.h.b16 %v2076
    %v2414 = vunpack.c.l.b16 %v2077
    %v2415 = vunpack.c.h.b16 %v2077
    %v2416 = vunpack.c.l.b16 %v2078
    %v2417 = vunpack.c.h.b16 %v2078
    %v2418 = vunpack.c.l.b16 %v2079
    %v2419 = vunpack.c.h.b16 %v2079
    %v2420 = vunpack.c.l.b16 %v2080
    %v2421 = vunpack.c.h.b16 %v2080
    %v2422 = vunpack.c.l.b16 %v2081
    %v2423 = vunpack.c.h.b16 %v2081
    %v2424 = vunpack.c.l.b16 %v2082
    %v2425 = vunpack.c.h.b16 %v2082
    %v2426 = vunpack.c.l.b16 %v2083
    %v2427 = vunpack.c.h.b16 %v2083
    %v2428 = vunpack.c.l.b16 %v2084
    %v2429 = vunpack.c.h.b16 %v2084
    %v2430 = vunpack.c.l.b16 %v2085
    %v2431 = vunpack.c.h.b16 %v2085
    %v2432 = vunpack.c.l.b16 %v2086
    %v2433 = vunpack.c.h.b16 %v2086
    %v2434 = vunpack.c.l.b16 %v2087
    %v2435 = vunpack.c.h.b16 %v2087
    %v2436 = vunpack.c.l.b16 %v2088
    %v2437 = vunpack.c.h.b16 %v2088
    %v2438 = vunpack.c.l.b16 %v2089
    %v2439 = vunpack.c.h.b16 %v2089
    %v2440 = vunpack.c.l.b16 %v2090
    %v2441 = vunpack.c.h.b16 %v2090
    %v2442 = vunpack.c.l.b16 %v2091
    %v2443 = vunpack.c.h.b16 %v2091
    %v2444 = vunpack.c.l.b16 %v2092
    %v2445 = vunpack.c.h.b16 %v2092
    %v2446 = vunpack.c.l.b16 %v2093
    %v2447 = vunpack.c.h.b16 %v2093
    %v2448 = vunpack.c.l.b16 %v2094
    %v2449 = vunpack.c.h.b16 %v2094
    %v2450 = vunpack.c.l.b16 %v2095
    %v2451 = vunpack.c.h.b16 %v2095
    %v2452 = vunpack.c.l.b16 %v2096
    %v2453 = vunpack.c.h.b16 %v2096
    %v2454 = vunpack.c.l.b16 %v2097
    %v2455 = vunpack.c.h.b16 %v2097
    %v2456 = vunpack.c.l.b16 %v2098
    %v2457 = vunpack.c.h.b16 %v2098
    %v2458 = vunpack.c.l.b16 %v2099
    %v2459 = vunpack.c.h.b16 %v2099
    %v2460 = vunpack.c.l.b16 %v2100
    %v2461 = vunpack.c.h.b16 %v2100
    %v2462 = vunpack.c.l.b16 %v2101
    %v2463 = vunpack.c.h.b16 %v2101
    %v2464 = vunpack.c.l.b16 %v2102
    %v2465 = vunpack.c.h.b16 %v2102
    %v2466 = vunpack.c.l.b16 %v2103
    %v2467 = vunpack.c.h.b16 %v2103
    %v2468 = vunpack.c.l.b16 %v2104
    %v2469 = vunpack.c.h.b16 %v2104
    %v2470 = vunpack.c.l.b16 %v2105
    %v2471 = vunpack.c.h.b16 %v2105
    %v2472 = vunpack.c.l.b16 %v2106
    %v2473 = vunpack.c.h.b16 %v2106
    %v2474 = vunpack.c.l.b16 %v2107
    %v2475 = vunpack.c.h.b16 %v2107
    %v2476 = vunpack.c.l.b16 %v2108
    %v2477 = vunpack.c.h.b16 %v2108
    %v2478 = vunpack.c.l.b16 %v2109
    %v2479 = vunpack.c.h.b16 %v2109
    %v2480 = vunpack.c.l.b16 %v2110
    %v2481 = vunpack.c.h.b16 %v2110
    %v2482 = vunpack.c.l.b16 %v2111
    %v2483 = vunpack.c.h.b16 %v2111
    %v2484 = vunpack.c.l.b16 %v2112
    %v2485 = vunpack.c.h.b16 %v2112
    %v2486 = vunpack.c.l.b16 %v2113
    %v2487 = vunpack.c.h.b16 %v2113
    %v2488 = vunpack.c.l.b16 %v2114
    %v2489 = vunpack.c.h.b16 %v2114
    %v2490 = vunpack.c.l.b16 %v2115
    %v2491 = vunpack.c.h.b16 %v2115
    %v2492 = vunpack.c.l.b16 %v2116
    %v2493 = vunpack.c.h.b16 %v2116
    %v2494 = vunpack.c.l.b16 %v2117
    %v2495 = vunpack.c.h.b16 %v2117
    %v2496 = vunpack.c.l.b16 %v2118
    %v2497 = vunpack.c.h.b16 %v2118
    %v2498 = vunpack.c.l.b16 %v2119
    %v2499 = vunpack.c.h.b16 %v2119
    %v2500 = vunpack.c.l.b16 %v2120
    %v2501 = vunpack.c.h.b16 %v2120
    %v2502 = vunpack.c.l.b16 %v2121
    %v2503 = vunpack.c.h.b16 %v2121
    %v2504 = vunpack.c.l.b16 %v2122
    %v2505 = vunpack.c.h.b16 %v2122
    %v2506 = vunpack.c.l.b16 %v2123
    %v2507 = vunpack.c.h.b16 %v2123
    %v2508 = vunpack.c.l.b16 %v2124
    %v2509 = vunpack.c.h.b16 %v2124
    %v2510 = vunpack.c.l.b16 %v2125
    %v2511 = vunpack.c.h.b16 %v2125
    %v2512 = vunpack.c.l.b16 %v2126
    %v2513 = vunpack.c.h.b16 %v2126
    %v2514 = vunpack.c.l.b16 %v2127
    %v2515 = vunpack.c.h.b16 %v2127
    %v2516 = vunpack.c.l.b16 %v2128
    %v2517 = vunpack.c.h.b16 %v2128
    %v2518 = vunpack.c.l.b16 %v2129
    %v2519 = vunpack.c.h.b16 %v2129
    %v2520 = vunpack.c.l.b16 %v2130
    %v2521 = vunpack.c.h.b16 %v2130
    %v2522 = vunpack.c.l.b16 %v2131
    %v2523 = vunpack.c.h.b16 %v2131
    %v2524 = vunpack.c.l.b16 %v2132
    %v2525 = vunpack.c.h.b16 %v2132
    %v2526 = vunpack.c.l.b16 %v2133
    %v2527 = vunpack.c.h.b16 %v2133
    %v2528 = vunpack.c.l.b16 %v2134
    %v2529 = vunpack.c.h.b16 %v2134
    %v2530 = vunpack.c.l.b16 %v2135
    %v2531 = vunpack.c.h.b16 %v2135
    %v2532 = vunpack.c.l.b16 %v2136
    %v2533 = vunpack.c.h.b16 %v2136
    %v2534 = vunpack.c.l.b16 %v2137
    %v2535 = vunpack.c.h.b16 %v2137
    %v2536 = vunpack.c.l.b16 %v2138
    %v2537 = vunpack.c.h.b16 %v2138
    %v2538 = vunpack.c.l.b16 %v2139
    %v2539 = vunpack.c.h.b16 %v2139
    %v2540 = vunpack.c.l.b16 %v2140
    %v2541 = vunpack.c.h.b16 %v2140
    %v2542 = vunpack.c.l.b16 %v2141
    %v2543 = vunpack.c.h.b16 %v2141
    %v2544 = vunpack.c.l.b16 %v2142
    %v2545 = vunpack.c.h.b16 %v2142
    %v2546 = vunpack.c.l.b16 %v2143
    %v2547 = vunpack.c.h.b16 %v2143
    %v2548 = vunpack.c.l.b16 %v2144
    %v2549 = vunpack.c.h.b16 %v2144
    %v2550 = vunpack.c.l.b16 %v2145
    %v2551 = vunpack.c.h.b16 %v2145
    %v2552 = vpack.c.b16 %v2300, %v2296
    %v2553 = vpack.c.b16 %v2301, %v2297
    %v2554 = vpack.c.b16 %v2302, %v2298
    %v2555 = vpack.c.b16 %v2303, %v2299
    %v2556 = vpack.c.b16 %v2308, %v2304
    %v2557 = vpack.c.b16 %v2309, %v2305
    %v2558 = vpack.c.b16 %v2310, %v2306
    %v2559 = vpack.c.b16 %v2311, %v2307
    %v2560 = vpack.c.b16 %v2316, %v2312
    %v2561 = vpack.c.b16 %v2317, %v2313
    %v2562 = vpack.c.b16 %v2318, %v2314
    %v2563 = vpack.c.b16 %v2319, %v2315
    %v2564 = vpack.c.b16 %v2324, %v2320
    %v2565 = vpack.c.b16 %v2325, %v2321
    %v2566 = vpack.c.b16 %v2326, %v2322
    %v2567 = vpack.c.b16 %v2327, %v2323
    %v2568 = vpack.c.b16 %v2332, %v2328
    %v2569 = vpack.c.b16 %v2333, %v2329
    %v2570 = vpack.c.b16 %v2334, %v2330
    %v2571 = vpack.c.b16 %v2335, %v2331
    %v2572 = vpack.c.b16 %v2340, %v2336
    %v2573 = vpack.c.b16 %v2341, %v2337
    %v2574 = vpack.c.b16 %v2342, %v2338
    %v2575 = vpack.c.b16 %v2343, %v2339
    %v2576 = vpack.c.b16 %v2348, %v2344
    %v2577 = vpack.c.b16 %v2349, %v2345
    %v2578 = vpack.c.b16 %v2350, %v2346
    %v2579 = vpack.c.b16 %v2351, %v2347
    %v2580 = vpack.c.b16 %v2356, %v2352
    %v2581 = vpack.c.b16 %v2357, %v2353
    %v2582 = vpack.c.b16 %v2358, %v2354
    %v2583 = vpack.c.b16 %v2359, %v2355
    %v2584 = vpack.c.b16 %v2364, %v2360
    %v2585 = vpack.c.b16 %v2365, %v2361
    %v2586 = vpack.c.b16 %v2366, %v2362
    %v2587 = vpack.c.b16 %v2367, %v2363
    %v2588 = vpack.c.b16 %v2372, %v2368
    %v2589 = vpack.c.b16 %v2373, %v2369
    %v2590 = vpack.c.b16 %v2374, %v2370
    %v2591 = vpack.c.b16 %v2375, %v2371
    %v2592 = vpack.c.b16 %v2380, %v2376
    %v2593 = vpack.c.b16 %v2381, %v2377
    %v2594 = vpack.c.b16 %v2382, %v2378
    %v2595 = vpack.c.b16 %v2383, %v2379
    %v2596 = vpack.c.b16 %v2388, %v2384
    %v2597 = vpack.c.b16 %v2389, %v2385
    %v2598 = vpack.c.b16 %v2390, %v2386
    %v2599 = vpack.c.b16 %v2391, %v2387
    %v2600 = vpack.c.b16 %v2396, %v2392
    %v2601 = vpack.c.b16 %v2397, %v2393
    %v2602 = vpack.c.b16 %v2398, %v2394
    %v2603 = vpack.c.b16 %v2399, %v2395
    %v2604 = vpack.c.b16 %v2404, %v2400
    %v2605 = vpack.c.b16 %v2405, %v2401
    %v2606 = vpack.c.b16 %v2406, %v2402
    %v2607 = vpack.c.b16 %v2407, %v2403
    %v2608 = vpack.c.b16 %v2412, %v2408
    %v2609 = vpack.c.b16 %v2413, %v2409
    %v2610 = vpack.c.b16 %v2414, %v2410
    %v2611 = vpack.c.b16 %v2415, %v2411
    %v2612 = vpack.c.b16 %v2420, %v2416
    %v2613 = vpack.c.b16 %v2421, %v2417
    %v2614 = vpack.c.b16 %v2422, %v2418
    %v2615 = vpack.c.b16 %v2423, %v2419
    %v2616 = vpack.c.b16 %v2428, %v2424
    %v2617 = vpack.c.b16 %v2429, %v2425
    %v2618 = vpack.c.b16 %v2430, %v2426
    %v2619 = vpack.c.b16 %v2431, %v2427
    %v2620 = vpack.c.b16 %v2436, %v2432
    %v2621 = vpack.c.b16 %v2437, %v2433
    %v2622 = vpack.c.b16 %v2438, %v2434
    %v2623 = vpack.c.b16 %v2439, %v2435
    %v2624 = vpack.c.b16 %v2444, %v2440
    %v2625 = vpack.c.b16 %v2445, %v2441
    %v2626 = vpack.c.b16 %v2446, %v2442
    %v2627 = vpack.c.b16 %v2447, %v2443
    %v2628 = vpack.c.b16 %v2452, %v2448
    %v2629 = vpack.c.b16 %v2453, %v2449
    %v2630 = vpack.c.b16 %v2454, %v2450
    %v2631 = vpack.c.b16 %v2455, %v2451
    %v2632 = vpack.c.b16 %v2460, %v2456
    %v2633 = vpack.c.b16 %v2461, %v2457
    %v2634 = vpack.c.b16 %v2462, %v2458
    %v2635 = vpack.c.b16 %v2463, %v2459
    %v2636 = vpack.c.b16 %v2468, %v2464
    %v2637 = vpack.c.b16 %v2469, %v2465
    %v2638 = vpack.c.b16 %v2470, %v2466
    %v2639 = vpack.c.b16 %v2471, %v2467
    %v2640 = vpack.c.b16 %v2476, %v2472
    %v2641 = vpack.c.b16 %v2477, %v2473
    %v2642 = vpack.c.b16 %v2478, %v2474
    %v2643 = vpack.c.b16 %v2479, %v2475
    %v2644 = vpack.c.b16 %v2484, %v2480
    %v2645 = vpack.c.b16 %v2485, %v2481
    %v2646 = vpack.c.b16 %v2486, %v2482
    %v2647 = vpack.c.b16 %v2487, %v2483
    %v2648 = vpack.c.b16 %v2492, %v2488
    %v2649 = vpack.c.b16 %v2493, %v2489
    %v2650 = vpack.c.b16 %v2494, %v2490
    %v2651 = vpack.c.b16 %v2495, %v2491
    %v2652 = vpack.c.b16 %v2500, %v2496
    %v2653 = vpack.c.b16 %v2501, %v2497
    %v2654 = vpack.c.b16 %v2502, %v2498
    %v2655 = vpack.c.b16 %v2503, %v2499
    %v2656 = vpack.c.b16 %v2508, %v2504
    %v2657 = vpack.c.b16 %v2509, %v2505
    %v2658 = vpack.c.b16 %v2510, %v2506
    %v2659 = vpack.c.b16 %v2511, %v2507
    %v2660 = vpack.c.b16 %v2516, %v2512
    %v2661 = vpack.c.b16 %v2517, %v2513
    %v2662 = vpack.c.b16 %v2518, %v2514
    %v2663 = vpack.c.b16 %v2519, %v2515
    %v2664 = vpack.c.b16 %v2524, %v2520
    %v2665 = vpack.c.b16 %v2525, %v2521
    %v2666 = vpack.c.b16 %v2526, %v2522
    %v2667 = vpack.c.b16 %v2527, %v2523
    %v2668 = vpack.c.b16 %v2532, %v2528
    %v2669 = vpack.c.b16 %v2533, %v2529
    %v2670 = vpack.c.b16 %v2534, %v2530
    %v2671 = vpack.c.b16 %v2535, %v2531
    %v2672 = vpack.c.b16 %v2540, %v2536
    %v2673 = vpack.c.b16 %v2541, %v2537
    %v2674 = vpack.c.b16 %v2542, %v2538
    %v2675 = vpack.c.b16 %v2543, %v2539
    %v2676 = vpack.c.b16 %v2548, %v2544
    %v2677 = vpack.c.b16 %v2549, %v2545
    %v2678 = vpack.c.b16 %v2550, %v2546
    %v2679 = vpack.c.b16 %v2551, %v2547
    %2808 = vmatprep.subr.bf16.mxu0 %v2553
    %2809 = vmatpush1.bf16.msra.mxu0 %v2552
    %2810 = vmatprep.subr.bf16.mxu0 %v2557
    %2811 = vmatpush1.bf16.msra.mxu0 %v2556
    %2812 = vmatprep.subr.bf16.mxu0 %v2561
    %2813 = vmatpush1.bf16.msra.mxu0 %v2560
    %2814 = vmatprep.subr.bf16.mxu0 %v2565
    %2815 = vmatpush1.bf16.msra.mxu0 %v2564
    %2816 = vmatprep.subr.bf16.mxu0 %v2569
    %2817 = vmatpush1.bf16.msra.mxu0 %v2568
    %2818 = vmatprep.subr.bf16.mxu0 %v2573
    %2819 = vmatpush1.bf16.msra.mxu0 %v2572
    %2820 = vmatprep.subr.bf16.mxu0 %v2577
    %2821 = vmatpush1.bf16.msra.mxu0 %v2576
    %2822 = vmatprep.subr.bf16.mxu0 %v2581
    %2823 = vmatpush1.bf16.msra.mxu0 %v2580
    %2824 = vmatprep.subr.bf16.mxu0 %v2585
    %2825 = vmatpush1.bf16.msra.mxu0 %v2584
    %2826 = vmatprep.subr.bf16.mxu0 %v2589
    %2827 = vmatpush1.bf16.msra.mxu0 %v2588
    %2828 = vmatprep.subr.bf16.mxu0 %v2593
    %2829 = vmatpush1.bf16.msra.mxu0 %v2592
    %2830 = vmatprep.subr.bf16.mxu0 %v2597
    %2831 = vmatpush1.bf16.msra.mxu0 %v2596
    %2832 = vmatprep.subr.bf16.mxu0 %v2601
    %2833 = vmatpush1.bf16.msra.mxu0 %v2600
    %2834 = vmatprep.subr.bf16.mxu0 %v2605
    %2835 = vmatpush1.bf16.msra.mxu0 %v2604
    %2836 = vmatprep.subr.bf16.mxu0 %v2609
    %2837 = vmatpush1.bf16.msra.mxu0 %v2608
    %2838 = vmatprep.subr.bf16.mxu0 %v2613
    %2839 = vmatpush1.bf16.msra.mxu0 %v2612
    %2840 = vmatprep.mubr.bf16.mxu0 %v2015
    %2841 = vmatmul.mubr.bf16.gmra.mrb[0].mxu0 %v2014
    %v2842 = vpop.f32.mrb[0].mxu0
    %v2843 = vadd.f32 %v2151, %v2842
    %v2844 = vpop.f32.mrb[0].mxu0
    %v2845 = vadd.f32 %v2155, %v2844
    %v2846 = vpop.f32.mrb[0].mxu0
    %v2847 = vadd.f32 %v2151, %v2846
    %v2848 = vpop.f32.mrb[0].mxu0
    %v2849 = vadd.f32 %v2155, %v2848
    %2850 = vdwg.mxu0
    %2851 = vmatprep.subr.bf16.mxu0 %v2617
    %2852 = vmatpush1.bf16.msra.mxu0 %v2616
    %2853 = vmatprep.subr.bf16.mxu0 %v2621
    %2854 = vmatpush1.bf16.msra.mxu0 %v2620
    %2855 = vmatprep.subr.bf16.mxu0 %v2625
    %2856 = vmatpush1.bf16.msra.mxu0 %v2624
    %2857 = vmatprep.subr.bf16.mxu0 %v2629
    %2858 = vmatpush1.bf16.msra.mxu0 %v2628
    %2859 = vmatprep.subr.bf16.mxu0 %v2633
    %2860 = vmatpush1.bf16.msra.mxu0 %v2632
    %2861 = vmatprep.subr.bf16.mxu0 %v2637
    %2862 = vmatpush1.bf16.msra.mxu0 %v2636
    %2863 = vmatprep.subr.bf16.mxu0 %v2641
    %2864 = vmatpush1.bf16.msra.mxu0 %v2640
    %2865 = vmatprep.subr.bf16.mxu0 %v2645
    %2866 = vmatpush1.bf16.msra.mxu0 %v2644
    %2867 = vmatprep.subr.bf16.mxu0 %v2649
    %2868 = vmatpush1.bf16.msra.mxu0 %v2648
    %2869 = vmatprep.subr.bf16.mxu0 %v2653
    %2870 = vmatpush1.bf16.msra.mxu0 %v2652
    %2871 = vmatprep.subr.bf16.mxu0 %v2657
    %2872 = vmatpush1.bf16.msra.mxu0 %v2656
    %2873 = vmatprep.subr.bf16.mxu0 %v2661
    %2874 = vmatpush1.bf16.msra.mxu0 %v2660
    %2875 = vmatprep.subr.bf16.mxu0 %v2665
    %2876 = vmatpush1.bf16.msra.mxu0 %v2664
    %2877 = vmatprep.subr.bf16.mxu0 %v2669
    %2878 = vmatpush1.bf16.msra.mxu0 %v2668
    %2879 = vmatprep.subr.bf16.mxu0 %v2673
    %2880 = vmatpush1.bf16.msra.mxu0 %v2672
    %2881 = vmatprep.subr.bf16.mxu0 %v2677
    %2882 = vmatpush1.bf16.msra.mxu0 %v2676
    %2883 = vmatprep.mubr.bf16.mxu0 %v2017
    %2884 = vmatmul.mubr.bf16.gmra.mrb[0].mxu0 %v2016
    %v2885 = vpop.f32.mrb[0].mxu0
    %v2886 = vadd.f32 %v2843, %v2885
    %v2887 = vpop.f32.mrb[0].mxu0
    %v2888 = vadd.f32 %v2845, %v2887
    %v2889 = vpop.f32.mrb[0].mxu0
    %v2890 = vadd.f32 %v2847, %v2889
    %v2891 = vpop.f32.mrb[0].mxu0
    %v2892 = vadd.f32 %v2849, %v2891
    %2893 = vdwg.mxu0
    %2894 = vmatprep.subr.bf16.mxu0 %v2555
    %2895 = vmatpush1.bf16.msra.mxu0 %v2554
    %2896 = vmatprep.subr.bf16.mxu0 %v2559
    %2897 = vmatpush1.bf16.msra.mxu0 %v2558
    %2898 = vmatprep.subr.bf16.mxu0 %v2563
    %2899 = vmatpush1.bf16.msra.mxu0 %v2562
    %2900 = vmatprep.subr.bf16.mxu0 %v2567
    %2901 = vmatpush1.bf16.msra.mxu0 %v2566
    %2902 = vmatprep.subr.bf16.mxu0 %v2571
    %2903 = vmatpush1.bf16.msra.mxu0 %v2570
    %2904 = vmatprep.subr.bf16.mxu0 %v2575
    %2905 = vmatpush1.bf16.msra.mxu0 %v2574
    %2906 = vmatprep.subr.bf16.mxu0 %v2579
    %2907 = vmatpush1.bf16.msra.mxu0 %v2578
    %2908 = vmatprep.subr.bf16.mxu0 %v2583
    %2909 = vmatpush1.bf16.msra.mxu0 %v2582
    %2910 = vmatprep.subr.bf16.mxu0 %v2587
    %2911 = vmatpush1.bf16.msra.mxu0 %v2586
    %2912 = vmatprep.subr.bf16.mxu0 %v2591
    %2913 = vmatpush1.bf16.msra.mxu0 %v2590
    %2914 = vmatprep.subr.bf16.mxu0 %v2595
    %2915 = vmatpush1.bf16.msra.mxu0 %v2594
    %2916 = vmatprep.subr.bf16.mxu0 %v2599
    %2917 = vmatpush1.bf16.msra.mxu0 %v2598
    %2918 = vmatprep.subr.bf16.mxu0 %v2603
    %2919 = vmatpush1.bf16.msra.mxu0 %v2602
    %2920 = vmatprep.subr.bf16.mxu0 %v2607
    %2921 = vmatpush1.bf16.msra.mxu0 %v2606
    %2922 = vmatprep.subr.bf16.mxu0 %v2611
    %2923 = vmatpush1.bf16.msra.mxu0 %v2610
    %2924 = vmatprep.subr.bf16.mxu0 %v2615
    %2925 = vmatpush1.bf16.msra.mxu0 %v2614
    %2926 = vmatprep.mubr.bf16.mxu0 %v2015
    %2927 = vmatmul.mubr.bf16.gmra.mrb[0].mxu0 %v2014
    %v2928 = vpop.f32.mrb[0].mxu0
    %v2929 = vadd.f32 %v2159, %v2928
    %v2930 = vpop.f32.mrb[0].mxu0
    %v2931 = vadd.f32 %v2163, %v2930
    %v2932 = vpop.f32.mrb[0].mxu0
    %v2933 = vadd.f32 %v2159, %v2932
    %v2934 = vpop.f32.mrb[0].mxu0
    %v2935 = vadd.f32 %v2163, %v2934
    %2936 = vdwg.mxu0
    %2937 = vmatprep.subr.bf16.mxu0 %v2619
    %2938 = vmatpush1.bf16.msra.mxu0 %v2618
    %2939 = vmatprep.subr.bf16.mxu0 %v2623
    %2940 = vmatpush1.bf16.msra.mxu0 %v2622
    %2941 = vmatprep.subr.bf16.mxu0 %v2627
    %2942 = vmatpush1.bf16.msra.mxu0 %v2626
    %2943 = vmatprep.subr.bf16.mxu0 %v2631
    %2944 = vmatpush1.bf16.msra.mxu0 %v2630
    %2945 = vmatprep.subr.bf16.mxu0 %v2635
    %2946 = vmatpush1.bf16.msra.mxu0 %v2634
    %2947 = vmatprep.subr.bf16.mxu0 %v2639
    %2948 = vmatpush1.bf16.msra.mxu0 %v2638
    %2949 = vmatprep.subr.bf16.mxu0 %v2643
    %2950 = vmatpush1.bf16.msra.mxu0 %v2642
    %2951 = vmatprep.subr.bf16.mxu0 %v2647
    %2952 = vmatpush1.bf16.msra.mxu0 %v2646
    %2953 = vmatprep.subr.bf16.mxu0 %v2651
    %2954 = vmatpush1.bf16.msra.mxu0 %v2650
    %2955 = vmatprep.subr.bf16.mxu0 %v2655
    %2956 = vmatpush1.bf16.msra.mxu0 %v2654
    %2957 = vmatprep.subr.bf16.mxu0 %v2659
    %2958 = vmatpush1.bf16.msra.mxu0 %v2658
    %2959 = vmatprep.subr.bf16.mxu0 %v2663
    %2960 = vmatpush1.bf16.msra.mxu0 %v2662
    %2961 = vmatprep.subr.bf16.mxu0 %v2667
    %2962 = vmatpush1.bf16.msra.mxu0 %v2666
    %2963 = vmatprep.subr.bf16.mxu0 %v2671
    %2964 = vmatpush1.bf16.msra.mxu0 %v2670
    %2965 = vmatprep.subr.bf16.mxu0 %v2675
    %2966 = vmatpush1.bf16.msra.mxu0 %v2674
    %2967 = vmatprep.subr.bf16.mxu0 %v2679
    %2968 = vmatpush1.bf16.msra.mxu0 %v2678
    %2969 = vmatprep.mubr.bf16.mxu0 %v2017
    %2970 = vmatmul.mubr.bf16.gmra.mrb[0].mxu0 %v2016
    %v2971 = vpop.f32.mrb[0].mxu0
    %v2972 = vadd.f32 %v2929, %v2971
    %v2973 = vpop.f32.mrb[0].mxu0
    %v2974 = vadd.f32 %v2931, %v2973
    %v2975 = vpop.f32.mrb[0].mxu0
    %v2976 = vadd.f32 %v2933, %v2975
    %v2977 = vpop.f32.mrb[0].mxu0
    %v2978 = vadd.f32 %v2935, %v2977
    %2979 = vdwg.mxu0
    %v2980 = vmax.f32 %v2886, 0.0
    %v2981 = vmax.f32 %v2888, 0.0
    %v2982 = vmax.f32 %v2972, 0.0
    %v2983 = vmax.f32 %v2974, 0.0
    %v2984 = vmax.f32 %v2890, 0.0
    %v2985 = vmax.f32 %v2892, 0.0
    %v2986 = vmax.f32 %v2976, 0.0
    %v2987 = vmax.f32 %v2978, 0.0
    %v2988 = vpack.c.bf16 %v2984, %v2980
    %v2989 = vpack.c.bf16 %v2985, %v2981
    %v2990 = vpack.c.bf16 %v2986, %v2982
    %v2991 = vpack.c.bf16 %v2987, %v2983
    %v2992 = vld [vmem:[%s5] sm:$0xf]
    %v2993 = vld [vmem:[%s5 + $0x4] sm:$0xf]
    %v2994 = vld [vmem:[%s5 + $0x8] sm:$0xf]
    %v2995 = vld [vmem:[%s5 + $0xc] sm:$0xf]
    %v2996 = vld [vmem:[%s5 + $0x10] sm:$0xf]
    %v2997 = vld [vmem:[%s5 + $0x14] sm:$0xf]
    %v2998 = vld [vmem:[%s5 + $0x18] sm:$0xf]
    %v2999 = vld [vmem:[%s5 + $0x1c] sm:$0xf]
    %v3000 = vld [vmem:[%s5 + $0x20] sm:$0xf]
    %v3001 = vld [vmem:[%s5 + $0x24] sm:$0xf]
    %v3002 = vld [vmem:[%s5 + $0x28] sm:$0xf]
    %v3003 = vld [vmem:[%s5 + $0x2c] sm:$0xf]
    %v3004 = vld [vmem:[%s5 + $0x30] sm:$0xf]
    %v3005 = vld [vmem:[%s5 + $0x34] sm:$0xf]
    %v3006 = vld [vmem:[%s5 + $0x38] sm:$0xf]
    %v3007 = vld [vmem:[%s5 + $0x3c] sm:$0xf]
    %v3008 = vld [vmem:[%s5 + $0x40] sm:$0xf]
    %v3009 = vld [vmem:[%s5 + $0x44] sm:$0xf]
    %v3010 = vld [vmem:[%s5 + $0x48] sm:$0xf]
    %v3011 = vld [vmem:[%s5 + $0x4c] sm:$0xf]
    %v3012 = vld [vmem:[%s5 + $0x50] sm:$0xf]
    %v3013 = vld [vmem:[%s5 + $0x54] sm:$0xf]
    %v3014 = vld [vmem:[%s5 + $0x58] sm:$0xf]
    %v3015 = vld [vmem:[%s5 + $0x5c] sm:$0xf]
    %v3016 = vld [vmem:[%s5 + $0x60] sm:$0xf]
    %v3017 = vld [vmem:[%s5 + $0x64] sm:$0xf]
    %v3018 = vld [vmem:[%s5 + $0x68] sm:$0xf]
    %v3019 = vld [vmem:[%s5 + $0x6c] sm:$0xf]
    %v3020 = vld [vmem:[%s5 + $0x70] sm:$0xf]
    %v3021 = vld [vmem:[%s5 + $0x74] sm:$0xf]
    %v3022 = vld [vmem:[%s5 + $0x78] sm:$0xf]
    %v3023 = vld [vmem:[%s5 + $0x7c] sm:$0xf]
    %v3024 = vld [vmem:[%s5 + $0x80] sm:$0xf]
    %v3025 = vld [vmem:[%s5 + $0x84] sm:$0xf]
    %v3026 = vld [vmem:[%s5 + $0x88] sm:$0xf]
    %v3027 = vld [vmem:[%s5 + $0x8c] sm:$0xf]
    %v3028 = vld [vmem:[%s5 + $0x90] sm:$0xf]
    %v3029 = vld [vmem:[%s5 + $0x94] sm:$0xf]
    %v3030 = vld [vmem:[%s5 + $0x98] sm:$0xf]
    %v3031 = vld [vmem:[%s5 + $0x9c] sm:$0xf]
    %v3032 = vld [vmem:[%s5 + $0xa0] sm:$0xf]
    %v3033 = vld [vmem:[%s5 + $0xa4] sm:$0xf]
    %v3034 = vld [vmem:[%s5 + $0xa8] sm:$0xf]
    %v3035 = vld [vmem:[%s5 + $0xac] sm:$0xf]
    %v3036 = vld [vmem:[%s5 + $0xb0] sm:$0xf]
    %v3037 = vld [vmem:[%s5 + $0xb4] sm:$0xf]
    %v3038 = vld [vmem:[%s5 + $0xb8] sm:$0xf]
    %v3039 = vld [vmem:[%s5 + $0xbc] sm:$0xf]
    %v3040 = vld [vmem:[%s5 + $0xc0] sm:$0xf]
    %v3041 = vld [vmem:[%s5 + $0xc4] sm:$0xf]
    %v3042 = vld [vmem:[%s5 + $0xc8] sm:$0xf]
    %v3043 = vld [vmem:[%s5 + $0xcc] sm:$0xf]
    %v3044 = vld [vmem:[%s5 + $0xd0] sm:$0xf]
    %v3045 = vld [vmem:[%s5 + $0xd4] sm:$0xf]
    %v3046 = vld [vmem:[%s5 + $0xd8] sm:$0xf]
    %v3047 = vld [vmem:[%s5 + $0xdc] sm:$0xf]
    %v3048 = vld [vmem:[%s5 + $0xe0] sm:$0xf]
    %v3049 = vld [vmem:[%s5 + $0xe4] sm:$0xf]
    %v3050 = vld [vmem:[%s5 + $0xe8] sm:$0xf]
    %v3051 = vld [vmem:[%s5 + $0xec] sm:$0xf]
    %v3052 = vld [vmem:[%s5 + $0xf0] sm:$0xf]
    %v3053 = vld [vmem:[%s5 + $0xf4] sm:$0xf]
    %v3054 = vld [vmem:[%s5 + $0xf8] sm:$0xf]
    %v3055 = vld [vmem:[%s5 + $0xfc] sm:$0xf]
    %v3056 = vld [vmem:[%s6] sm:$0x1]
    %v3058 = vlaneseq
    %v3059 = vshrl.u32 %v3058, 7
    %v3060 = vsub.s32 0, %v3059
    %v3061 = vrot.slane %v3056, %v3060
    %v3127 = vunpack.c.l.b16 %v2992
    %v3128 = vunpack.c.l.b16 %v2993
    %v3129 = vunpack.c.l.b16 %v2994
    %v3130 = vunpack.c.l.b16 %v2995
    %v3131 = vunpack.c.l.b16 %v2996
    %v3132 = vunpack.c.l.b16 %v2997
    %v3133 = vunpack.c.l.b16 %v2998
    %v3134 = vunpack.c.l.b16 %v2999
    %v3135 = vunpack.c.l.b16 %v3000
    %v3136 = vunpack.c.l.b16 %v3001
    %v3137 = vunpack.c.l.b16 %v3002
    %v3138 = vunpack.c.l.b16 %v3003
    %v3139 = vunpack.c.l.b16 %v3004
    %v3140 = vunpack.c.l.b16 %v3005
    %v3141 = vunpack.c.l.b16 %v3006
    %v3142 = vunpack.c.l.b16 %v3007
    %v3143 = vunpack.c.l.b16 %v3008
    %v3144 = vunpack.c.l.b16 %v3009
    %v3145 = vunpack.c.l.b16 %v3010
    %v3146 = vunpack.c.l.b16 %v3011
    %v3147 = vunpack.c.l.b16 %v3012
    %v3148 = vunpack.c.l.b16 %v3013
    %v3149 = vunpack.c.l.b16 %v3014
    %v3150 = vunpack.c.l.b16 %v3015
    %v3151 = vunpack.c.l.b16 %v3016
    %v3152 = vunpack.c.l.b16 %v3017
    %v3153 = vunpack.c.l.b16 %v3018
    %v3154 = vunpack.c.l.b16 %v3019
    %v3155 = vunpack.c.l.b16 %v3020
    %v3156 = vunpack.c.l.b16 %v3021
    %v3157 = vunpack.c.l.b16 %v3022
    %v3158 = vunpack.c.l.b16 %v3023
    %v3159 = vunpack.c.l.b16 %v3024
    %v3160 = vunpack.c.l.b16 %v3025
    %v3161 = vunpack.c.l.b16 %v3026
    %v3162 = vunpack.c.l.b16 %v3027
    %v3163 = vunpack.c.l.b16 %v3028
    %v3164 = vunpack.c.l.b16 %v3029
    %v3165 = vunpack.c.l.b16 %v3030
    %v3166 = vunpack.c.l.b16 %v3031
    %v3167 = vunpack.c.l.b16 %v3032
    %v3168 = vunpack.c.l.b16 %v3033
    %v3169 = vunpack.c.l.b16 %v3034
    %v3170 = vunpack.c.l.b16 %v3035
    %v3171 = vunpack.c.l.b16 %v3036
    %v3172 = vunpack.c.l.b16 %v3037
    %v3173 = vunpack.c.l.b16 %v3038
    %v3174 = vunpack.c.l.b16 %v3039
    %v3175 = vunpack.c.l.b16 %v3040
    %v3176 = vunpack.c.l.b16 %v3041
    %v3177 = vunpack.c.l.b16 %v3042
    %v3178 = vunpack.c.l.b16 %v3043
    %v3179 = vunpack.c.l.b16 %v3044
    %v3180 = vunpack.c.l.b16 %v3045
    %v3181 = vunpack.c.l.b16 %v3046
    %v3182 = vunpack.c.l.b16 %v3047
    %v3183 = vunpack.c.l.b16 %v3048
    %v3184 = vunpack.c.l.b16 %v3049
    %v3185 = vunpack.c.l.b16 %v3050
    %v3186 = vunpack.c.l.b16 %v3051
    %v3187 = vunpack.c.l.b16 %v3052
    %v3188 = vunpack.c.l.b16 %v3053
    %v3189 = vunpack.c.l.b16 %v3054
    %v3190 = vunpack.c.l.b16 %v3055
    %v3191 = vpack.c.b16 %v3128, %v3127
    %v3192 = vpack.c.b16 %v3130, %v3129
    %v3193 = vpack.c.b16 %v3132, %v3131
    %v3194 = vpack.c.b16 %v3134, %v3133
    %v3195 = vpack.c.b16 %v3136, %v3135
    %v3196 = vpack.c.b16 %v3138, %v3137
    %v3197 = vpack.c.b16 %v3140, %v3139
    %v3198 = vpack.c.b16 %v3142, %v3141
    %v3199 = vpack.c.b16 %v3144, %v3143
    %v3200 = vpack.c.b16 %v3146, %v3145
    %v3201 = vpack.c.b16 %v3148, %v3147
    %v3202 = vpack.c.b16 %v3150, %v3149
    %v3203 = vpack.c.b16 %v3152, %v3151
    %v3204 = vpack.c.b16 %v3154, %v3153
    %v3205 = vpack.c.b16 %v3156, %v3155
    %v3206 = vpack.c.b16 %v3158, %v3157
    %v3207 = vpack.c.b16 %v3160, %v3159
    %v3208 = vpack.c.b16 %v3162, %v3161
    %v3209 = vpack.c.b16 %v3164, %v3163
    %v3210 = vpack.c.b16 %v3166, %v3165
    %v3211 = vpack.c.b16 %v3168, %v3167
    %v3212 = vpack.c.b16 %v3170, %v3169
    %v3213 = vpack.c.b16 %v3172, %v3171
    %v3214 = vpack.c.b16 %v3174, %v3173
    %v3215 = vpack.c.b16 %v3176, %v3175
    %v3216 = vpack.c.b16 %v3178, %v3177
    %v3217 = vpack.c.b16 %v3180, %v3179
    %v3218 = vpack.c.b16 %v3182, %v3181
    %v3219 = vpack.c.b16 %v3184, %v3183
    %v3220 = vpack.c.b16 %v3186, %v3185
    %v3221 = vpack.c.b16 %v3188, %v3187
    %v3222 = vpack.c.b16 %v3190, %v3189
    %3255 = vmatprep.subr.bf16.mxu0 0
    %3256 = vmatpush1.bf16.msra.mxu0 %v3191
    %3257 = vmatprep.subr.bf16.mxu0 0
    %3258 = vmatpush1.bf16.msra.mxu0 %v3192
    %3259 = vmatprep.subr.bf16.mxu0 0
    %3260 = vmatpush1.bf16.msra.mxu0 %v3193
    %3261 = vmatprep.subr.bf16.mxu0 0
    %3262 = vmatpush1.bf16.msra.mxu0 %v3194
    %3263 = vmatprep.subr.bf16.mxu0 0
    %3264 = vmatpush1.bf16.msra.mxu0 %v3195
    %3265 = vmatprep.subr.bf16.mxu0 0
    %3266 = vmatpush1.bf16.msra.mxu0 %v3196
    %3267 = vmatprep.subr.bf16.mxu0 0
    %3268 = vmatpush1.bf16.msra.mxu0 %v3197
    %3269 = vmatprep.subr.bf16.mxu0 0
    %3270 = vmatpush1.bf16.msra.mxu0 %v3198
    %3271 = vmatprep.subr.bf16.mxu0 0
    %3272 = vmatpush1.bf16.msra.mxu0 %v3199
    %3273 = vmatprep.subr.bf16.mxu0 0
    %3274 = vmatpush1.bf16.msra.mxu0 %v3200
    %3275 = vmatprep.subr.bf16.mxu0 0
    %3276 = vmatpush1.bf16.msra.mxu0 %v3201
    %3277 = vmatprep.subr.bf16.mxu0 0
    %3278 = vmatpush1.bf16.msra.mxu0 %v3202
    %3279 = vmatprep.subr.bf16.mxu0 0
    %3280 = vmatpush1.bf16.msra.mxu0 %v3203
    %3281 = vmatprep.subr.bf16.mxu0 0
    %3282 = vmatpush1.bf16.msra.mxu0 %v3204
    %3283 = vmatprep.subr.bf16.mxu0 0
    %3284 = vmatpush1.bf16.msra.mxu0 %v3205
    %3285 = vmatprep.subr.bf16.mxu0 0
    %3286 = vmatpush1.bf16.msra.mxu0 %v3206
    %3287 = vmatprep.mubr.bf16.mxu0 %v2989
    %3288 = vmatmul.mubr.bf16.gmra.mrb[0].mxu0 %v2988
    %v3289 = vpop.f32.mrb[0].mxu0
    %v3290 = vadd.f32 %v3061, %v3289
    %v3291 = vpop.f32.mrb[0].mxu0
    %v3292 = vpop.f32.mrb[0].mxu0
    %v3293 = vadd.f32 %v3061, %v3292
    %v3294 = vpop.f32.mrb[0].mxu0
    %3295 = vdwg.mxu0
    %3296 = vmatprep.subr.bf16.mxu0 0
    %3297 = vmatpush1.bf16.msra.mxu0 %v3207
    %3298 = vmatprep.subr.bf16.mxu0 0
    %3299 = vmatpush1.bf16.msra.mxu0 %v3208
    %3300 = vmatprep.subr.bf16.mxu0 0
    %3301 = vmatpush1.bf16.msra.mxu0 %v3209
    %3302 = vmatprep.subr.bf16.mxu0 0
    %3303 = vmatpush1.bf16.msra.mxu0 %v3210
    %3304 = vmatprep.subr.bf16.mxu0 0
    %3305 = vmatpush1.bf16.msra.mxu0 %v3211
    %3306 = vmatprep.subr.bf16.mxu0 0
    %3307 = vmatpush1.bf16.msra.mxu0 %v3212
    %3308 = vmatprep.subr.bf16.mxu0 0
    %3309 = vmatpush1.bf16.msra.mxu0 %v3213
    %3310 = vmatprep.subr.bf16.mxu0 0
    %3311 = vmatpush1.bf16.msra.mxu0 %v3214
    %3312 = vmatprep.subr.bf16.mxu0 0
    %3313 = vmatpush1.bf16.msra.mxu0 %v3215
    %3314 = vmatprep.subr.bf16.mxu0 0
    %3315 = vmatpush1.bf16.msra.mxu0 %v3216
    %3316 = vmatprep.subr.bf16.mxu0 0
    %3317 = vmatpush1.bf16.msra.mxu0 %v3217
    %3318 = vmatprep.subr.bf16.mxu0 0
    %3319 = vmatpush1.bf16.msra.mxu0 %v3218
    %3320 = vmatprep.subr.bf16.mxu0 0
    %3321 = vmatpush1.bf16.msra.mxu0 %v3219
    %3322 = vmatprep.subr.bf16.mxu0 0
    %3323 = vmatpush1.bf16.msra.mxu0 %v3220
    %3324 = vmatprep.subr.bf16.mxu0 0
    %3325 = vmatpush1.bf16.msra.mxu0 %v3221
    %3326 = vmatprep.subr.bf16.mxu0 0
    %3327 = vmatpush1.bf16.msra.mxu0 %v3222
    %3328 = vmatprep.mubr.bf16.mxu0 %v2991
    %3329 = vmatmul.mubr.bf16.gmra.mrb[0].mxu0 %v2990
    %v3330 = vpop.f32.mrb[0].mxu0
    %v3331 = vadd.f32 %v3290, %v3330
    %v3332 = vpop.f32.mrb[0].mxu0
    %v3333 = vpop.f32.mrb[0].mxu0
    %v3334 = vadd.f32 %v3293, %v3333
    %v3335 = vpop.f32.mrb[0].mxu0
    %3336 = vdwg.mxu0
    %vm3337 = vcmask 523264
    %3338 = vst.msk [vmem:[#allocation7] sm:$0xff] %vm3337, %v3331
    %3339 = vst.msk [vmem:[#allocation7 + $0x8] sm:$0xff] %vm3337, %v3334
    // Predicated region
    $region38: #{tpu_custom_call.1} parent=1 // pred_check
      _
    $region39: #{tpu_custom_call.1} parent=1 // pred_check_branch
      %3341 = sbr.rel (0) target = $region41
    $region40: #{tpu_custom_call.1} parent=1 // pred_region
      %s3343 = ssub.s32 256, 256
      %3344 = vsyncadd [#allocation4], %s3343
      %s3345 = sshll.u32 [#allocation7], 4
      %s3346 = int_to_ptr.vmem [resolvable:$true] %s3345
      %3351 = dma.vmem_to_hbm [thread:$0]  %s3346, 256, %s7, [#allocation4], 128, 128, 8
    $region41: #{tpu_custom_call.1} parent=1 // pred_fallthru
      _
    // Predicated region
    $region42: #{tpu_custom_call.1} parent=1 // pred_check
      _
    $region43: #{tpu_custom_call.1} parent=1 // pred_check_branch
      %3353 = sbr.rel (0) target = $region45
    $region44: #{tpu_custom_call.1} parent=1 // pred_region
      %3354 = dma.done [#allocation4], 256
    $region45: #{tpu_custom_call.1} parent=1 // pred_fallthru
      _
    %3355 = vsyncpa [#allocation3], 1
    %3356 = vsyncpa [#allocation6], 1
    %3357 = vsyncpa [#allocation4], 1

</llo_original>
